<compile_context>
chip_gen: v7x
topology: tpu7x:2x2x1
jax: 0.10.0
libtpu: 0.0.40
codegen_flags: <defaults>
</compile_context>

<pallas_src>
import functools

import jax
import jax.numpy as jnp
from jax.experimental import pallas as pl
from jax.experimental.pallas import tpu as pltpu

_SUB = 128  # rows per inner sub-tile (MXU-friendly, bounds live vregs)


def _distillery_kernel(x_ref, w1_ref, b1_ref, w2_ref, b2_ref,
                       w3_ref, b3_ref, wt_ref, bt_ref, out_ref,
                       *, n_sub, obs, bf16_matmul):
    # Loop-invariant loads, hoisted out of the sub-tile loop (JAX does not CSE
    # broadcasts, so do them exactly once here).
    w2 = w2_ref[...]                         # [hid, hid] (bf16 when bf16_matmul)
    b1 = b1_ref[...]                         # [1, hid]
    b2 = b2_ref[...]                         # [1, hid]
    w3 = w3_ref[...]                         # [1, hid]
    b3 = b3_ref[0, 0]                        # SMEM scalar
    bt = bt_ref[0, 0]                        # SMEM scalar
    wt = [wt_ref[0, k] for k in range(obs)]  # SMEM scalars (trn_net weights)

    def sub_tile(t, carry):
        row = pl.multiple_of(t * _SUB, _SUB)
        x = x_ref[pl.ds(row, _SUB), :]       # [SUB, obs]

        # --- ref_net layer 1 (K = obs, tiny): VPU broadcast FMAs, not the MXU.
        #     trn_net (obs -> 1) is fused on the same column slices using SMEM
        #     scalars: no extra vreg load, no cross-lane (XLU) reduction.
        h1 = b1
        trn = bt
        for k in range(obs):                 # obs is static -> unrolled
            xk = x[:, k:k + 1]               # [SUB, 1]
            h1 = h1 + xk * w1_ref[k:k + 1, :]
            trn = trn + xk * wt[k]
        h1 = jnp.maximum(h1, 0.0)            # [SUB, hid]

        # --- ref_net layer 2: the only MXU matmul.
        if bf16_matmul:
            h2 = jnp.dot(h1.astype(jnp.bfloat16), w2,
                         preferred_element_type=jnp.float32)
        else:
            h2 = jnp.dot(h1, w2,
                         precision=jax.lax.Precision.HIGHEST,
                         preferred_element_type=jnp.float32)
        h2 = jnp.maximum(h2 + b2, 0.0)       # [SUB, hid]

        # --- ref_net layer 3 (N = 1): lane reduction + SMEM scalar bias.
        ref = jnp.sum(h2 * w3, axis=-1, keepdims=True) + b3   # [SUB, 1]

        # Single packed store: column 0 = ref head, column 1 = trn head.
        lane = jax.lax.broadcasted_iota(jnp.int32, (_SUB, 2), 1)
        out_ref[pl.ds(row, _SUB), :] = jnp.where(lane == 0, ref, trn)
        return carry

    jax.lax.fori_loop(0, n_sub, sub_tile, 0, unroll=True)


def _choose_subs_per_block(n_sub_total: int, max_subs: int = 8) -> int:
    """Pick sub-tiles per block (block <= 1024 rows): the largest divisor of
    the total sub-tile count that keeps a multi-step grid when possible, or
    covers the whole (small) batch in one block otherwise."""
    best = 1
    for c in range(1, max_subs + 1):
        if n_sub_total % c == 0 and (n_sub_total // c >= 2 or c == n_sub_total):
            best = c
    return best


def mountain_car_distillery_forward(x, params, *, bf16_matmul=False):
    """x: [B, obs] float32.  Returns (ref_out [B,1], trn_out [B,1])."""
    B, obs = x.shape
    hid = params["w1"].shape[1]

    # Pad the batch to a multiple of the 128-row sub-tile so every batch size
    # follows the same tiled, bounded-vreg path (pad rows compute garbage and
    # are sliced off at the end).
    B_pad = ((B + _SUB - 1) // _SUB) * _SUB
    n_sub_total = B_pad // _SUB
    subs_per_block = _choose_subs_per_block(n_sub_total)
    block_b = subs_per_block * _SUB
    grid = (B_pad // block_b,)

    if B_pad != B:
        x = jnp.pad(x, ((0, B_pad - B), (0, 0)))

    w2 = params["w2"].astype(jnp.bfloat16) if bf16_matmul else params["w2"]

    smem = pltpu.MemorySpace.SMEM

    flops = 2 * B_pad * (obs * hid + hid * hid + hid + obs)
    bytes_accessed = 4 * (B_pad * obs + obs * hid + hid + hid * hid + hid
                          + hid + 1 + obs + 1 + B_pad * 2)

    kernel = functools.partial(_distillery_kernel, n_sub=subs_per_block,
                               obs=obs, bf16_matmul=bf16_matmul)

    out = pl.pallas_call(
        kernel,
        out_shape=jax.ShapeDtypeStruct((B_pad, 2), jnp.float32),
        grid=grid,
        in_specs=[
            pl.BlockSpec((block_b, obs), lambda i: (i, 0)),   # x
            pl.BlockSpec((obs, hid), lambda i: (0, 0)),       # w1
            pl.BlockSpec((1, hid), lambda i: (0, 0)),         # b1
            pl.BlockSpec((hid, hid), lambda i: (0, 0)),       # w2
            pl.BlockSpec((1, hid), lambda i: (0, 0)),         # b2
            pl.BlockSpec((1, hid), lambda i: (0, 0)),         # w3 (row)
            pl.BlockSpec(memory_space=smem),                  # b3 scalar (SMEM)
            pl.BlockSpec(memory_space=smem),                  # wt row    (SMEM)
            pl.BlockSpec(memory_space=smem),                  # bt scalar (SMEM)
        ],
        out_specs=pl.BlockSpec((block_b, 2), lambda i: (i, 0)),
        compiler_params=pltpu.CompilerParams(
            dimension_semantics=("parallel",)),
        cost_estimate=pl.CostEstimate(flops=flops, transcendentals=0,
                                      bytes_accessed=bytes_accessed),
    )(x,
      params["w1"], params["b1"],
      w2, params["b2"],
      params["w3_row"], params["b3"],
      params["wt_row"], params["bt"])

    return out[:B, 0:1], out[:B, 1:2]


def init_params(key, obs_size, hid_size):
    """Deterministic synthetic init (PyTorch Linear-style uniform bounds).
    Weights stored pre-transposed as [in_features, out_features]; the two
    out_features==1 weights are stored as rows for the head computations."""
    ks = jax.random.split(key, 8)

    def lin(kw, kb, fan_in, fan_out):
        bound = 1.0 / jnp.sqrt(jnp.float32(fan_in))
        w = jax.random.uniform(kw, (fan_in, fan_out), jnp.float32, -bound, bound)
        b = jax.random.uniform(kb, (1, fan_out), jnp.float32, -bound, bound)
        return w, b

    w1, b1 = lin(ks[0], ks[1], obs_size, hid_size)
    w2, b2 = lin(ks[2], ks[3], hid_size, hid_size)
    w3, b3 = lin(ks[4], ks[5], hid_size, 1)
    wt, bt = lin(ks[6], ks[7], obs_size, 1)
    return {"w1": w1, "b1": b1, "w2": w2, "b2": b2,
            "w3_row": w3.T, "b3": b3,     # [1, hid], [1, 1]
            "wt_row": wt.T, "bt": bt}     # [1, obs], [1, 1]


def reference_forward(x, p):
    hp = jax.lax.Precision.HIGHEST
    h1 = jnp.maximum(jnp.dot(x, p["w1"], precision=hp) + p["b1"], 0.0)
    h2 = jnp.maximum(jnp.dot(h1, p["w2"], precision=hp) + p["b2"], 0.0)
    ref = jnp.dot(h2, p["w3_row"].T, precision=hp) + p["b3"]
    trn = jnp.dot(x, p["wt_row"].T, precision=hp) + p["bt"]
    return ref, trn


if __name__ == "__main__":
    obs_size, hid_size = 2, 128   # MountainCar obs dim = 2, hid = 128

    key = jax.random.PRNGKey(0)
    kp, kx = jax.random.split(key)
    params = init_params(kp, obs_size, hid_size)

    fwd = jax.jit(mountain_car_distillery_forward)

    # Small canonical case + batches that exercise padding, the inner sub-tile
    # loop, and a multi-step grid.
    for batch in (8, 300, 1280):
        x = jax.random.normal(jax.random.fold_in(kx, batch),
                              (batch, obs_size), jnp.float32)
        ref_out, trn_out = fwd(x, params)
        jax.block_until_ready((ref_out, trn_out))

        ref_ref, trn_ref = reference_forward(x, params)
        assert ref_out.shape == (batch, 1) and trn_out.shape == (batch, 1)
        assert jnp.allclose(ref_out, ref_ref, atol=1e-4, rtol=1e-4), \
            f"ref head mismatch at batch={batch}"
        assert jnp.allclose(trn_out, trn_ref, atol=1e-4, rtol=1e-4), \
            f"trn head mismatch at batch={batch}"

    print("KERNEL_OK")
</pallas_src>

<mosaic_0001>
module attributes {stable_mosaic.version = 11 : i64} {
  func.func @_distillery_kernel(%arg0: i32, %arg1: memref<128x2xf32, #tpu.memory_space<vmem>>, %arg2: memref<2x128xf32, #tpu.memory_space<vmem>>, %arg3: memref<1x128xf32, #tpu.memory_space<vmem>>, %arg4: memref<128x128xf32, #tpu.memory_space<vmem>>, %arg5: memref<1x128xf32, #tpu.memory_space<vmem>>, %arg6: memref<1x128xf32, #tpu.memory_space<vmem>>, %arg7: memref<1x1xf32, #tpu.memory_space<smem>>, %arg8: memref<1x2xf32, #tpu.memory_space<smem>>, %arg9: memref<1x1xf32, #tpu.memory_space<smem>>, %arg10: memref<128x2xf32, #tpu.memory_space<vmem>>) attributes {dimension_semantics = [#tpu.dimension_semantics<parallel>], iteration_bounds = array<i64: 1>, scalar_prefetch = 0 : i64, scratch_operands = 0 : i64, tpu.core_type = #tpu.core_type<tc>, window_params = [{transform_indices = @transform_0, window_bounds = array<i64: 128, 2>}, {pipeline_mode = #tpu.pipeline_mode<synchronous>, transform_indices = @transform_1, window_bounds = array<i64: 2, 128>}, {pipeline_mode = #tpu.pipeline_mode<synchronous>, transform_indices = @transform_2, window_bounds = array<i64: 1, 128>}, {pipeline_mode = #tpu.pipeline_mode<synchronous>, transform_indices = @transform_3, window_bounds = array<i64: 128, 128>}, {pipeline_mode = #tpu.pipeline_mode<synchronous>, transform_indices = @transform_4, window_bounds = array<i64: 1, 128>}, {pipeline_mode = #tpu.pipeline_mode<synchronous>, transform_indices = @transform_5, window_bounds = array<i64: 1, 128>}, {transform_indices = @transform_6, window_bounds = array<i64: 1, 1>}, {transform_indices = @transform_7, window_bounds = array<i64: 1, 2>}, {transform_indices = @transform_8, window_bounds = array<i64: 1, 1>}, {transform_indices = @transform_9, window_bounds = array<i64: 128, 2>}]} {
    %c0 = arith.constant 0 : index
    %c0_0 = arith.constant 0 : index
    %0 = vector.load %arg4[%c0, %c0_0] : memref<128x128xf32, #tpu.memory_space<vmem>>, vector<128x128xf32>
    %c0_1 = arith.constant 0 : index
    %c0_2 = arith.constant 0 : index
    %1 = vector.load %arg3[%c0_1, %c0_2] : memref<1x128xf32, #tpu.memory_space<vmem>>, vector<1x128xf32>
    %c0_3 = arith.constant 0 : index
    %c0_4 = arith.constant 0 : index
    %2 = vector.load %arg5[%c0_3, %c0_4] : memref<1x128xf32, #tpu.memory_space<vmem>>, vector<1x128xf32>
    %c0_5 = arith.constant 0 : index
    %c0_6 = arith.constant 0 : index
    %3 = vector.load %arg6[%c0_5, %c0_6] : memref<1x128xf32, #tpu.memory_space<vmem>>, vector<1x128xf32>
    %c0_7 = arith.constant 0 : index
    %c0_8 = arith.constant 0 : index
    %4 = memref.load %arg7[%c0_7, %c0_8] : memref<1x1xf32, #tpu.memory_space<smem>>
    %c0_9 = arith.constant 0 : index
    %c0_10 = arith.constant 0 : index
    %5 = memref.load %arg9[%c0_9, %c0_10] : memref<1x1xf32, #tpu.memory_space<smem>>
    %c0_11 = arith.constant 0 : index
    %c0_12 = arith.constant 0 : index
    %6 = memref.load %arg8[%c0_11, %c0_12] : memref<1x2xf32, #tpu.memory_space<smem>>
    %c0_13 = arith.constant 0 : index
    %c1 = arith.constant 1 : index
    %7 = memref.load %arg8[%c0_13, %c1] : memref<1x2xf32, #tpu.memory_space<smem>>
    %c0_i32 = arith.constant 0 : i32
    %c128_i32 = arith.constant 128 : i32
    %8 = arith.muli %c0_i32, %c128_i32 : i32
    %9 = tpu.assume_multiple %8, 128 : i32
    %10 = arith.index_cast %9 : i32 to index
    %c0_14 = arith.constant 0 : index
    %11 = vector.load %arg1[%10, %c0_14] : memref<128x2xf32, #tpu.memory_space<vmem>>, vector<128x2xf32>
    %12 = vector.extract_strided_slice %11 {offsets = [0, 0], sizes = [128, 1], strides = [1, 1]} : vector<128x2xf32> to vector<128x1xf32>
    %c0_15 = arith.constant 0 : index
    %c0_16 = arith.constant 0 : index
    %13 = vector.load %arg2[%c0_15, %c0_16] : memref<2x128xf32, #tpu.memory_space<vmem>>, vector<1x128xf32>
    %14 = vector.broadcast %12 : vector<128x1xf32> to vector<128x128xf32>
    %15 = vector.broadcast %13 : vector<1x128xf32> to vector<128x128xf32>
    %16 = arith.mulf %14, %15 : vector<128x128xf32>
    %17 = vector.broadcast %1 : vector<1x128xf32> to vector<128x128xf32>
    %18 = arith.addf %17, %16 : vector<128x128xf32>
    %19 = vector.broadcast %6 : f32 to vector<128x1xf32>
    %20 = arith.mulf %12, %19 : vector<128x1xf32>
    %21 = vector.broadcast %5 : f32 to vector<128x1xf32>
    %22 = arith.addf %21, %20 : vector<128x1xf32>
    %23 = vector.extract_strided_slice %11 {offsets = [0, 1], sizes = [128, 1], strides = [1, 1]} : vector<128x2xf32> to vector<128x1xf32>
    %c1_17 = arith.constant 1 : index
    %c0_18 = arith.constant 0 : index
    %24 = vector.load %arg2[%c1_17, %c0_18] : memref<2x128xf32, #tpu.memory_space<vmem>>, vector<1x128xf32>
    %25 = vector.broadcast %23 : vector<128x1xf32> to vector<128x128xf32>
    %26 = vector.broadcast %24 : vector<1x128xf32> to vector<128x128xf32>
    %27 = arith.mulf %25, %26 : vector<128x128xf32>
    %28 = arith.addf %18, %27 : vector<128x128xf32>
    %29 = vector.broadcast %7 : f32 to vector<128x1xf32>
    %30 = arith.mulf %23, %29 : vector<128x1xf32>
    %31 = arith.addf %22, %30 : vector<128x1xf32>
    %cst = arith.constant 0.000000e+00 : f32
    %32 = vector.broadcast %cst : f32 to vector<128x128xf32>
    %33 = arith.maximumf %28, %32 : vector<128x128xf32>
    %cst_19 = arith.constant dense<0.000000e+00> : vector<128x128xf32>
    %34 = tpu.matmul %33, %0, %cst_19 {dimension_numbers = #tpu.dot_dimension_numbers<[1], [0], [0], [1], [0, 0, 1, 1], [], []>, precision = #tpu.contract_precision<fp32>} : vector<128x128xf32>, vector<128x128xf32>, vector<128x128xf32> -> vector<128x128xf32>
    %35 = vector.broadcast %2 : vector<1x128xf32> to vector<128x128xf32>
    %36 = arith.addf %34, %35 : vector<128x128xf32>
    %cst_20 = arith.constant 0.000000e+00 : f32
    %37 = vector.broadcast %cst_20 : f32 to vector<128x128xf32>
    %38 = arith.maximumf %36, %37 : vector<128x128xf32>
    %39 = vector.broadcast %3 : vector<1x128xf32> to vector<128x128xf32>
    %40 = arith.mulf %38, %39 : vector<128x128xf32>
    %cst_21 = arith.constant dense<0.000000e+00> : vector<128xf32>
    %41 = vector.multi_reduction <add>, %40, %cst_21 [1] : vector<128x128xf32> to vector<128xf32>
    %42 = vector.shape_cast %41 : vector<128xf32> to vector<128x1xf32>
    %43 = vector.broadcast %4 : f32 to vector<128x1xf32>
    %44 = arith.addf %42, %43 : vector<128x1xf32>
    %45 = tpu.iota {dimensions = array<i32: 1>} : vector<128x2xi32>
    %c0_i32_22 = arith.constant 0 : i32
    %46 = vector.broadcast %c0_i32_22 : i32 to vector<128x2xi32>
    %47 = arith.cmpi eq, %45, %46 : vector<128x2xi32>
    %48 = vector.shape_cast %44 : vector<128x1xf32> to vector<128x1xf32>
    %49 = vector.broadcast %48 : vector<128x1xf32> to vector<128x2xf32>
    %50 = vector.shape_cast %31 : vector<128x1xf32> to vector<128x1xf32>
    %51 = vector.broadcast %50 : vector<128x1xf32> to vector<128x2xf32>
    %52 = arith.select %47, %49, %51 : vector<128x2xi1>, vector<128x2xf32>
    %53 = arith.index_cast %9 : i32 to index
    %c0_23 = arith.constant 0 : index
    %54 = vector.load %arg10[%53, %c0_23] : memref<128x2xf32, #tpu.memory_space<vmem>>, vector<128x2xf32>
    tpu.vector_store %arg10[%53, %c0_23], %52 {strides = array<i32>} : memref<128x2xf32, #tpu.memory_space<vmem>>, vector<128x2xf32>,
    %c1_i32 = arith.constant 1 : i32
    return
  }
  func.func @transform_0(%arg0: i32) -> (i32, i32) {
    %c0_i32 = arith.constant 0 : i32
    %c0_i32_0 = arith.constant 0 : i32
    return %arg0, %c0_i32 : i32, i32
  }
  func.func @transform_1(%arg0: i32) -> (i32, i32) {
    %c0_i32 = arith.constant 0 : i32
    %c0_i32_0 = arith.constant 0 : i32
    %c0_i32_1 = arith.constant 0 : i32
    return %c0_i32, %c0_i32_0 : i32, i32
  }
  func.func @transform_2(%arg0: i32) -> (i32, i32) {
    %c0_i32 = arith.constant 0 : i32
    %c0_i32_0 = arith.constant 0 : i32
    %c0_i32_1 = arith.constant 0 : i32
    return %c0_i32, %c0_i32_0 : i32, i32
  }
  func.func @transform_3(%arg0: i32) -> (i32, i32) {
    %c0_i32 = arith.constant 0 : i32
    %c0_i32_0 = arith.constant 0 : i32
    %c0_i32_1 = arith.constant 0 : i32
    return %c0_i32, %c0_i32_0 : i32, i32
  }
  func.func @transform_4(%arg0: i32) -> (i32, i32) {
    %c0_i32 = arith.constant 0 : i32
    %c0_i32_0 = arith.constant 0 : i32
    %c0_i32_1 = arith.constant 0 : i32
    return %c0_i32, %c0_i32_0 : i32, i32
  }
  func.func @transform_5(%arg0: i32) -> (i32, i32) {
    %c0_i32 = arith.constant 0 : i32
    %c0_i32_0 = arith.constant 0 : i32
    %c0_i32_1 = arith.constant 0 : i32
    return %c0_i32, %c0_i32_0 : i32, i32
  }
  func.func @transform_6(%arg0: i32) -> (i32, i32) {
    %c0_i32 = arith.constant 0 : i32
    %c0_i32_0 = arith.constant 0 : i32
    %c0_i32_1 = arith.constant 0 : i32
    return %c0_i32, %c0_i32_0 : i32, i32
  }
  func.func @transform_7(%arg0: i32) -> (i32, i32) {
    %c0_i32 = arith.constant 0 : i32
    %c0_i32_0 = arith.constant 0 : i32
    %c0_i32_1 = arith.constant 0 : i32
    return %c0_i32, %c0_i32_0 : i32, i32
  }
  func.func @transform_8(%arg0: i32) -> (i32, i32) {
    %c0_i32 = arith.constant 0 : i32
    %c0_i32_0 = arith.constant 0 : i32
    %c0_i32_1 = arith.constant 0 : i32
    return %c0_i32, %c0_i32_0 : i32, i32
  }
  func.func @transform_9(%arg0: i32) -> (i32, i32) {
    %c0_i32 = arith.constant 0 : i32
    %c0_i32_0 = arith.constant 0 : i32
    return %arg0, %c0_i32 : i32, i32
  }
}

</mosaic_0001>

<llo_original>
// kernel: mountain_car_distillery_forward.1
$region0: #{mountain_car_distillery_forward.1}
  #allocation0 [shape = 'u32[]', space=smem, size = 0x4, offset = 0x4, fixed_abs, tag = 'smem constant byte address 0x4 - core index']
  #allocation1 [shape = 'u32[144,128]{1,0:T(1,128)}', space=vmem, size = 0x12000, scoped, tag = 'internal scratch']
  #allocation2 [shape = 'f32[1,1]{1,0:T(1,128)S(6)}', space=smem, size = 0x200, scoped, tag = 'scoped memory for mountain_car_distillery_forward.1']
  #allocation3 [shape = 'f32[1,1]{1,0:T(1,128)S(6)}', space=smem, size = 0x200, scoped, tag = 'scoped memory for mountain_car_distillery_forward.1']
  %s0 = inlined_call_operand.vmem [shape: f32[128,2], index: 0, kind: input, shape index: {}]
  %s1 = inlined_call_operand.vmem [shape: f32[2,128], index: 1, kind: input, shape index: {}]
  %s2 = inlined_call_operand.vmem [shape: f32[1,128], index: 2, kind: input, shape index: {}]
  %s3 = inlined_call_operand.vmem [shape: f32[128,128], index: 3, kind: input, shape index: {}]
  %s4 = inlined_call_operand.vmem [shape: f32[1,128], index: 4, kind: input, shape index: {}]
  %s5 = inlined_call_operand.vmem [shape: f32[1,128], index: 5, kind: input, shape index: {}]
  %s6 = inlined_call_operand.<no memory space> [shape: f32[1,1], index: 6, kind: input, shape index: {}]
  %s7 = inlined_call_operand.vmem [shape: f32[1,2], index: 7, kind: input, shape index: {}]
  %s8 = inlined_call_operand.<no memory space> [shape: f32[1,1], index: 8, kind: input, shape index: {}]
  %s9 = inlined_call_operand.vmem [shape: f32[128,2], index: 9, kind: output, shape index: {}]
  %s10 = sld [smem:[#allocation0]]
  $region50: #{mountain_car_distillery_forward.1} parent=0
    _
  %s12 = ssub.s32 1, %s10
  %s13 = scalar_select 0, %s12, %s10
  %14 = sst [smem:[#allocation2]] %s6
  %15 = sst [smem:[#allocation3]] %s8
  $region1: #{mountain_car_distillery_forward.1} parent=0
    #allocation4 [shape = 'u8[512]{0}', space=smem, size = 0x200, scoped, tag = 'input window, operand 7, single buffered']
    #allocation5 [shape = 's32[1]{0}', space=sflag, size = 0x4, scoped, tag = 'scoped memory for mountain_car_distillery_forward.1']
    %16 = vsyncpa [#allocation5], 0
    // Predicated region
    $region2: #{mountain_car_distillery_forward.1} parent=1 // pred_check
      _
    $region3: #{mountain_car_distillery_forward.1} parent=1 // pred_check_branch
      %18 = sbr.rel (0) target = $region5
    $region4: #{mountain_car_distillery_forward.1} parent=1 // pred_region
      _
    $region5: #{mountain_car_distillery_forward.1} parent=1 // pred_fallthru
      _
    // Predicated region
    $region6: #{mountain_car_distillery_forward.1} parent=1 // pred_check
      _
    $region7: #{mountain_car_distillery_forward.1} parent=1 // pred_check_branch
      %20 = sbr.rel (0) target = $region9
    $region8: #{mountain_car_distillery_forward.1} parent=1 // pred_region
      _
    $region9: #{mountain_car_distillery_forward.1} parent=1 // pred_fallthru
      _
    // Predicated region
    $region10: #{mountain_car_distillery_forward.1} parent=1 // pred_check
      _
    $region11: #{mountain_car_distillery_forward.1} parent=1 // pred_check_branch
      %22 = sbr.rel (0) target = $region13
    $region12: #{mountain_car_distillery_forward.1} parent=1 // pred_region
      _
    $region13: #{mountain_car_distillery_forward.1} parent=1 // pred_fallthru
      _
    // Predicated region
    $region14: #{mountain_car_distillery_forward.1} parent=1 // pred_check
      _
    $region15: #{mountain_car_distillery_forward.1} parent=1 // pred_check_branch
      %24 = sbr.rel (0) target = $region17
    $region16: #{mountain_car_distillery_forward.1} parent=1 // pred_region
      _
    $region17: #{mountain_car_distillery_forward.1} parent=1 // pred_fallthru
      _
    // Predicated region
    $region18: #{mountain_car_distillery_forward.1} parent=1 // pred_check
      _
    $region19: #{mountain_car_distillery_forward.1} parent=1 // pred_check_branch
      %26 = sbr.rel (0) target = $region21
    $region20: #{mountain_car_distillery_forward.1} parent=1 // pred_region
      _
    $region21: #{mountain_car_distillery_forward.1} parent=1 // pred_fallthru
      _
    // Predicated region
    $region22: #{mountain_car_distillery_forward.1} parent=1 // pred_check
      _
    $region23: #{mountain_car_distillery_forward.1} parent=1 // pred_check_branch
      %28 = sbr.rel (0) target = $region25
    $region24: #{mountain_car_distillery_forward.1} parent=1 // pred_region
      _
    $region25: #{mountain_car_distillery_forward.1} parent=1 // pred_fallthru
      _
    // Predicated region
    $region26: #{mountain_car_distillery_forward.1} parent=1 // pred_check
      _
    $region27: #{mountain_car_distillery_forward.1} parent=1 // pred_check_branch
      %30 = sbr.rel (0) target = $region29
    $region28: #{mountain_car_distillery_forward.1} parent=1 // pred_region
      _
    $region29: #{mountain_car_distillery_forward.1} parent=1 // pred_fallthru
      _
    // Predicated region
    $region30: #{mountain_car_distillery_forward.1} parent=1 // pred_check
      _
    $region31: #{mountain_car_distillery_forward.1} parent=1 // pred_check_branch
      %32 = sbr.rel (0) target = $region33
    $region32: #{mountain_car_distillery_forward.1} parent=1 // pred_region
      %s34 = ssub.s32 16, 16
      %35 = vsyncadd [#allocation5], %s34
      %s37 = sshll.u32 %s7, 4
      %s38 = int_to_ptr.vmem [resolvable:$true] %s37
      %40 = dma.vmem_to_smem %s38, 16, [#allocation4], [#allocation5]
    $region33: #{mountain_car_distillery_forward.1} parent=1 // pred_fallthru
      _
    // Predicated region
    $region34: #{mountain_car_distillery_forward.1} parent=1 // pred_check
      _
    $region35: #{mountain_car_distillery_forward.1} parent=1 // pred_check_branch
      %42 = sbr.rel (0) target = $region37
    $region36: #{mountain_car_distillery_forward.1} parent=1 // pred_region
      _
    $region37: #{mountain_car_distillery_forward.1} parent=1 // pred_fallthru
      _
    // Predicated region
    $region38: #{mountain_car_distillery_forward.1} parent=1 // pred_check
      _
    $region39: #{mountain_car_distillery_forward.1} parent=1 // pred_check_branch
      %44 = sbr.rel (0) target = $region41
    $region40: #{mountain_car_distillery_forward.1} parent=1 // pred_region
      %45 = dma.done [#allocation5], 16
    $region41: #{mountain_car_distillery_forward.1} parent=1 // pred_fallthru
      _
    %46 = sfence
    %v47 = vld [vmem:[%s3] sm:$0xff]
    %v48 = vld [vmem:[%s3 + $0x8] sm:$0xff]
    %v49 = vld [vmem:[%s3 + $0x10] sm:$0xff]
    %v50 = vld [vmem:[%s3 + $0x18] sm:$0xff]
    %v51 = vld [vmem:[%s3 + $0x20] sm:$0xff]
    %v52 = vld [vmem:[%s3 + $0x28] sm:$0xff]
    %v53 = vld [vmem:[%s3 + $0x30] sm:$0xff]
    %v54 = vld [vmem:[%s3 + $0x38] sm:$0xff]
    %v55 = vld [vmem:[%s3 + $0x40] sm:$0xff]
    %v56 = vld [vmem:[%s3 + $0x48] sm:$0xff]
    %v57 = vld [vmem:[%s3 + $0x50] sm:$0xff]
    %v58 = vld [vmem:[%s3 + $0x58] sm:$0xff]
    %v59 = vld [vmem:[%s3 + $0x60] sm:$0xff]
    %v60 = vld [vmem:[%s3 + $0x68] sm:$0xff]
    %v61 = vld [vmem:[%s3 + $0x70] sm:$0xff]
    %v62 = vld [vmem:[%s3 + $0x78] sm:$0xff]
    %v63 = vld [vmem:[%s2] sm:$0x1]
    %v64 = vld [vmem:[%s4] sm:$0x1]
    %v65 = vld [vmem:[%s5] sm:$0x1]
    %s66 = sld [smem:[#allocation2]]
    %s67 = sld [smem:[#allocation3]]
    %s68 = sld [smem:[#allocation4]]
    %s69 = sld [smem:[#allocation4 + $0x1]]
    %v70 = vld [vmem:[%s0] sm:$0xff]
    %v71 = vld [vmem:[%s0 + $0x8] sm:$0xff]
    %v72 = vld [vmem:[%s0 + $0x10] sm:$0xff]
    %v73 = vld [vmem:[%s0 + $0x18] sm:$0xff]
    %v74 = vld [vmem:[%s0 + $0x20] sm:$0xff]
    %v75 = vld [vmem:[%s0 + $0x28] sm:$0xff]
    %v76 = vld [vmem:[%s0 + $0x30] sm:$0xff]
    %v77 = vld [vmem:[%s0 + $0x38] sm:$0xff]
    %v78 = vld [vmem:[%s0 + $0x40] sm:$0xff]
    %v79 = vld [vmem:[%s0 + $0x48] sm:$0xff]
    %v80 = vld [vmem:[%s0 + $0x50] sm:$0xff]
    %v81 = vld [vmem:[%s0 + $0x58] sm:$0xff]
    %v82 = vld [vmem:[%s0 + $0x60] sm:$0xff]
    %v83 = vld [vmem:[%s0 + $0x68] sm:$0xff]
    %v84 = vld [vmem:[%s0 + $0x70] sm:$0xff]
    %v85 = vld [vmem:[%s0 + $0x78] sm:$0xff]
    %v86 = vld [vmem:[%s1] sm:$0x1]
    %88 = vset.pattern.permute.xlu0 0
    %89 = vperm.xlu0 %88, %v70
    %v90 = vpop.permute.xlu0 %89
    %93 = vset.pattern.permute.xlu0 0
    %94 = vperm.xlu0 %93, %v71
    %v95 = vpop.permute.xlu0 %94
    %98 = vset.pattern.permute.xlu0 0
    %99 = vperm.xlu0 %98, %v72
    %v100 = vpop.permute.xlu0 %99
    %103 = vset.pattern.permute.xlu0 0
    %104 = vperm.xlu0 %103, %v73
    %v105 = vpop.permute.xlu0 %104
    %108 = vset.pattern.permute.xlu0 0
    %109 = vperm.xlu0 %108, %v74
    %v110 = vpop.permute.xlu0 %109
    %113 = vset.pattern.permute.xlu0 0
    %114 = vperm.xlu0 %113, %v75
    %v115 = vpop.permute.xlu0 %114
    %118 = vset.pattern.permute.xlu0 0
    %119 = vperm.xlu0 %118, %v76
    %v120 = vpop.permute.xlu0 %119
    %123 = vset.pattern.permute.xlu0 0
    %124 = vperm.xlu0 %123, %v77
    %v125 = vpop.permute.xlu0 %124
    %128 = vset.pattern.permute.xlu0 0
    %129 = vperm.xlu0 %128, %v78
    %v130 = vpop.permute.xlu0 %129
    %133 = vset.pattern.permute.xlu0 0
    %134 = vperm.xlu0 %133, %v79
    %v135 = vpop.permute.xlu0 %134
    %138 = vset.pattern.permute.xlu0 0
    %139 = vperm.xlu0 %138, %v80
    %v140 = vpop.permute.xlu0 %139
    %143 = vset.pattern.permute.xlu0 0
    %144 = vperm.xlu0 %143, %v81
    %v145 = vpop.permute.xlu0 %144
    %148 = vset.pattern.permute.xlu0 0
    %149 = vperm.xlu0 %148, %v82
    %v150 = vpop.permute.xlu0 %149
    %153 = vset.pattern.permute.xlu0 0
    %154 = vperm.xlu0 %153, %v83
    %v155 = vpop.permute.xlu0 %154
    %158 = vset.pattern.permute.xlu0 0
    %159 = vperm.xlu0 %158, %v84
    %v160 = vpop.permute.xlu0 %159
    %163 = vset.pattern.permute.xlu0 0
    %164 = vperm.xlu0 %163, %v85
    %v165 = vpop.permute.xlu0 %164
    %v167 = vlaneseq
    %v168 = vshrl.u32 %v167, 7
    %v169 = vsub.s32 0, %v168
    %v170 = vrot.slane %v86, %v169
    %v171 = vmul.f32 %v90, %v170
    %v172 = vmul.f32 %v95, %v170
    %v173 = vmul.f32 %v100, %v170
    %v174 = vmul.f32 %v105, %v170
    %v175 = vmul.f32 %v110, %v170
    %v176 = vmul.f32 %v115, %v170
    %v177 = vmul.f32 %v120, %v170
    %v178 = vmul.f32 %v125, %v170
    %v179 = vmul.f32 %v130, %v170
    %v180 = vmul.f32 %v135, %v170
    %v181 = vmul.f32 %v140, %v170
    %v182 = vmul.f32 %v145, %v170
    %v183 = vmul.f32 %v150, %v170
    %v184 = vmul.f32 %v155, %v170
    %v185 = vmul.f32 %v160, %v170
    %v186 = vmul.f32 %v165, %v170
    %v188 = vlaneseq
    %v189 = vshrl.u32 %v188, 7
    %v190 = vsub.s32 0, %v189
    %v191 = vrot.slane %v63, %v190
    %v193 = vadd.f32 %v191, %v171
    %v194 = vadd.f32 %v191, %v172
    %v195 = vadd.f32 %v191, %v173
    %v196 = vadd.f32 %v191, %v174
    %v197 = vadd.f32 %v191, %v175
    %v198 = vadd.f32 %v191, %v176
    %v199 = vadd.f32 %v191, %v177
    %v200 = vadd.f32 %v191, %v178
    %v201 = vadd.f32 %v191, %v179
    %v202 = vadd.f32 %v191, %v180
    %v203 = vadd.f32 %v191, %v181
    %v204 = vadd.f32 %v191, %v182
    %v205 = vadd.f32 %v191, %v183
    %v206 = vadd.f32 %v191, %v184
    %v207 = vadd.f32 %v191, %v185
    %v208 = vadd.f32 %v191, %v186
    %v209 = vstv %s68
    %v210 = vmul.f32 %v70, %v209
    %v211 = vmul.f32 %v71, %v209
    %v212 = vmul.f32 %v72, %v209
    %v213 = vmul.f32 %v73, %v209
    %v214 = vmul.f32 %v74, %v209
    %v215 = vmul.f32 %v75, %v209
    %v216 = vmul.f32 %v76, %v209
    %v217 = vmul.f32 %v77, %v209
    %v218 = vmul.f32 %v78, %v209
    %v219 = vmul.f32 %v79, %v209
    %v220 = vmul.f32 %v80, %v209
    %v221 = vmul.f32 %v81, %v209
    %v222 = vmul.f32 %v82, %v209
    %v223 = vmul.f32 %v83, %v209
    %v224 = vmul.f32 %v84, %v209
    %v225 = vmul.f32 %v85, %v209
    %v226 = vstv %s67
    %v227 = vadd.f32 %v226, %v210
    %v228 = vadd.f32 %v226, %v211
    %v229 = vadd.f32 %v226, %v212
    %v230 = vadd.f32 %v226, %v213
    %v231 = vadd.f32 %v226, %v214
    %v232 = vadd.f32 %v226, %v215
    %v233 = vadd.f32 %v226, %v216
    %v234 = vadd.f32 %v226, %v217
    %v235 = vadd.f32 %v226, %v218
    %v236 = vadd.f32 %v226, %v219
    %v237 = vadd.f32 %v226, %v220
    %v238 = vadd.f32 %v226, %v221
    %v239 = vadd.f32 %v226, %v222
    %v240 = vadd.f32 %v226, %v223
    %v241 = vadd.f32 %v226, %v224
    %v242 = vadd.f32 %v226, %v225
    %v243 = vld [vmem:[%s1 + $0x1] sm:$0x1]
    %244 = vset.pattern.permute.xlu0 1
    %245 = vperm.xlu0 %244, %v70
    %v246 = vpop.permute.xlu0 %245
    %248 = vset.pattern.permute.xlu0 1
    %249 = vperm.xlu0 %248, %v71
    %v250 = vpop.permute.xlu0 %249
    %252 = vset.pattern.permute.xlu0 1
    %253 = vperm.xlu0 %252, %v72
    %v254 = vpop.permute.xlu0 %253
    %256 = vset.pattern.permute.xlu0 1
    %257 = vperm.xlu0 %256, %v73
    %v258 = vpop.permute.xlu0 %257
    %260 = vset.pattern.permute.xlu0 1
    %261 = vperm.xlu0 %260, %v74
    %v262 = vpop.permute.xlu0 %261
    %264 = vset.pattern.permute.xlu0 1
    %265 = vperm.xlu0 %264, %v75
    %v266 = vpop.permute.xlu0 %265
    %268 = vset.pattern.permute.xlu0 1
    %269 = vperm.xlu0 %268, %v76
    %v270 = vpop.permute.xlu0 %269
    %272 = vset.pattern.permute.xlu0 1
    %273 = vperm.xlu0 %272, %v77
    %v274 = vpop.permute.xlu0 %273
    %276 = vset.pattern.permute.xlu0 1
    %277 = vperm.xlu0 %276, %v78
    %v278 = vpop.permute.xlu0 %277
    %280 = vset.pattern.permute.xlu0 1
    %281 = vperm.xlu0 %280, %v79
    %v282 = vpop.permute.xlu0 %281
    %284 = vset.pattern.permute.xlu0 1
    %285 = vperm.xlu0 %284, %v80
    %v286 = vpop.permute.xlu0 %285
    %288 = vset.pattern.permute.xlu0 1
    %289 = vperm.xlu0 %288, %v81
    %v290 = vpop.permute.xlu0 %289
    %292 = vset.pattern.permute.xlu0 1
    %293 = vperm.xlu0 %292, %v82
    %v294 = vpop.permute.xlu0 %293
    %296 = vset.pattern.permute.xlu0 1
    %297 = vperm.xlu0 %296, %v83
    %v298 = vpop.permute.xlu0 %297
    %300 = vset.pattern.permute.xlu0 1
    %301 = vperm.xlu0 %300, %v84
    %v302 = vpop.permute.xlu0 %301
    %304 = vset.pattern.permute.xlu0 1
    %305 = vperm.xlu0 %304, %v85
    %v306 = vpop.permute.xlu0 %305
    %v308 = vlaneseq
    %v309 = vshrl.u32 %v308, 7
    %v310 = vsub.s32 0, %v309
    %v311 = vrot.slane %v243, %v310
    %v312 = vmul.f32 %v246, %v311
    %v313 = vmul.f32 %v250, %v311
    %v314 = vmul.f32 %v254, %v311
    %v315 = vmul.f32 %v258, %v311
    %v316 = vmul.f32 %v262, %v311
    %v317 = vmul.f32 %v266, %v311
    %v318 = vmul.f32 %v270, %v311
    %v319 = vmul.f32 %v274, %v311
    %v320 = vmul.f32 %v278, %v311
    %v321 = vmul.f32 %v282, %v311
    %v322 = vmul.f32 %v286, %v311
    %v323 = vmul.f32 %v290, %v311
    %v324 = vmul.f32 %v294, %v311
    %v325 = vmul.f32 %v298, %v311
    %v326 = vmul.f32 %v302, %v311
    %v327 = vmul.f32 %v306, %v311
    %v328 = vadd.f32 %v193, %v312
    %v329 = vadd.f32 %v194, %v313
    %v330 = vadd.f32 %v195, %v314
    %v331 = vadd.f32 %v196, %v315
    %v332 = vadd.f32 %v197, %v316
    %v333 = vadd.f32 %v198, %v317
    %v334 = vadd.f32 %v199, %v318
    %v335 = vadd.f32 %v200, %v319
    %v336 = vadd.f32 %v201, %v320
    %v337 = vadd.f32 %v202, %v321
    %v338 = vadd.f32 %v203, %v322
    %v339 = vadd.f32 %v204, %v323
    %v340 = vadd.f32 %v205, %v324
    %v341 = vadd.f32 %v206, %v325
    %v342 = vadd.f32 %v207, %v326
    %v343 = vadd.f32 %v208, %v327
    %v344 = vstv %s69
    %v345 = vmul.f32 %v70, %v344
    %v346 = vmul.f32 %v71, %v344
    %v347 = vmul.f32 %v72, %v344
    %v348 = vmul.f32 %v73, %v344
    %v349 = vmul.f32 %v74, %v344
    %v350 = vmul.f32 %v75, %v344
    %v351 = vmul.f32 %v76, %v344
    %v352 = vmul.f32 %v77, %v344
    %v353 = vmul.f32 %v78, %v344
    %v354 = vmul.f32 %v79, %v344
    %v355 = vmul.f32 %v80, %v344
    %v356 = vmul.f32 %v81, %v344
    %v357 = vmul.f32 %v82, %v344
    %v358 = vmul.f32 %v83, %v344
    %v359 = vmul.f32 %v84, %v344
    %v360 = vmul.f32 %v85, %v344
    %377 = vrot.lane.b32.xlu0 %v345, 127
    %v378 = vpop.permute.xlu0 %377
    %379 = vrot.lane.b32.xlu0 %v346, 127
    %v380 = vpop.permute.xlu0 %379
    %381 = vrot.lane.b32.xlu0 %v347, 127
    %v382 = vpop.permute.xlu0 %381
    %383 = vrot.lane.b32.xlu0 %v348, 127
    %v384 = vpop.permute.xlu0 %383
    %385 = vrot.lane.b32.xlu0 %v349, 127
    %v386 = vpop.permute.xlu0 %385
    %387 = vrot.lane.b32.xlu0 %v350, 127
    %v388 = vpop.permute.xlu0 %387
    %389 = vrot.lane.b32.xlu0 %v351, 127
    %v390 = vpop.permute.xlu0 %389
    %391 = vrot.lane.b32.xlu0 %v352, 127
    %v392 = vpop.permute.xlu0 %391
    %393 = vrot.lane.b32.xlu0 %v353, 127
    %v394 = vpop.permute.xlu0 %393
    %395 = vrot.lane.b32.xlu0 %v354, 127
    %v396 = vpop.permute.xlu0 %395
    %397 = vrot.lane.b32.xlu0 %v355, 127
    %v398 = vpop.permute.xlu0 %397
    %399 = vrot.lane.b32.xlu0 %v356, 127
    %v400 = vpop.permute.xlu0 %399
    %401 = vrot.lane.b32.xlu0 %v357, 127
    %v402 = vpop.permute.xlu0 %401
    %403 = vrot.lane.b32.xlu0 %v358, 127
    %v404 = vpop.permute.xlu0 %403
    %405 = vrot.lane.b32.xlu0 %v359, 127
    %v406 = vpop.permute.xlu0 %405
    %407 = vrot.lane.b32.xlu0 %v360, 127
    %v408 = vpop.permute.xlu0 %407
    %v425 = vadd.f32 %v227, %v378
    %v426 = vadd.f32 %v228, %v380
    %v427 = vadd.f32 %v229, %v382
    %v428 = vadd.f32 %v230, %v384
    %v429 = vadd.f32 %v231, %v386
    %v430 = vadd.f32 %v232, %v388
    %v431 = vadd.f32 %v233, %v390
    %v432 = vadd.f32 %v234, %v392
    %v433 = vadd.f32 %v235, %v394
    %v434 = vadd.f32 %v236, %v396
    %v435 = vadd.f32 %v237, %v398
    %v436 = vadd.f32 %v238, %v400
    %v437 = vadd.f32 %v239, %v402
    %v438 = vadd.f32 %v240, %v404
    %v439 = vadd.f32 %v241, %v406
    %v440 = vadd.f32 %v242, %v408
    %v441 = vmax.f32 %v328, 0.0
    %v442 = vmax.f32 %v329, 0.0
    %v443 = vmax.f32 %v330, 0.0
    %v444 = vmax.f32 %v331, 0.0
    %v445 = vmax.f32 %v332, 0.0
    %v446 = vmax.f32 %v333, 0.0
    %v447 = vmax.f32 %v334, 0.0
    %v448 = vmax.f32 %v335, 0.0
    %v449 = vmax.f32 %v336, 0.0
    %v450 = vmax.f32 %v337, 0.0
    %v451 = vmax.f32 %v338, 0.0
    %v452 = vmax.f32 %v339, 0.0
    %v453 = vmax.f32 %v340, 0.0
    %v454 = vmax.f32 %v341, 0.0
    %v455 = vmax.f32 %v342, 0.0
    %v456 = vmax.f32 %v343, 0.0
    %v458 = vlaneseq
    %v459 = vshrl.u32 %v458, 7
    %v460 = vsub.s32 0, %v459
    %v461 = vrot.slane %v64, %v460
    %463 = vmatprep.subr.mxu0 0.0
    %v464 = vand.u32 %v47, 4294901760
    %465 = vmatpush1.msra.mxu0 %v464
    %466 = vmatprep.subr.mxu0 0.0
    %v467 = vand.u32 %v48, 4294901760
    %468 = vmatpush1.msra.mxu0 %v467
    %469 = vmatprep.subr.mxu0 0.0
    %v470 = vand.u32 %v49, 4294901760
    %471 = vmatpush1.msra.mxu0 %v470
    %472 = vmatprep.subr.mxu0 0.0
    %v473 = vand.u32 %v50, 4294901760
    %474 = vmatpush1.msra.mxu0 %v473
    %475 = vmatprep.subr.mxu0 0.0
    %v476 = vand.u32 %v51, 4294901760
    %477 = vmatpush1.msra.mxu0 %v476
    %478 = vmatprep.subr.mxu0 0.0
    %v479 = vand.u32 %v52, 4294901760
    %480 = vmatpush1.msra.mxu0 %v479
    %481 = vmatprep.subr.mxu0 0.0
    %v482 = vand.u32 %v53, 4294901760
    %483 = vmatpush1.msra.mxu0 %v482
    %484 = vmatprep.subr.mxu0 0.0
    %v485 = vand.u32 %v54, 4294901760
    %486 = vmatpush1.msra.mxu0 %v485
    %487 = vmatprep.subr.mxu0 0.0
    %v488 = vand.u32 %v55, 4294901760
    %489 = vmatpush1.msra.mxu0 %v488
    %490 = vmatprep.subr.mxu0 0.0
    %v491 = vand.u32 %v56, 4294901760
    %492 = vmatpush1.msra.mxu0 %v491
    %493 = vmatprep.subr.mxu0 0.0
    %v494 = vand.u32 %v57, 4294901760
    %495 = vmatpush1.msra.mxu0 %v494
    %496 = vmatprep.subr.mxu0 0.0
    %v497 = vand.u32 %v58, 4294901760
    %498 = vmatpush1.msra.mxu0 %v497
    %499 = vmatprep.subr.mxu0 0.0
    %v500 = vand.u32 %v59, 4294901760
    %501 = vmatpush1.msra.mxu0 %v500
    %502 = vmatprep.subr.mxu0 0.0
    %v503 = vand.u32 %v60, 4294901760
    %504 = vmatpush1.msra.mxu0 %v503
    %505 = vmatprep.subr.mxu0 0.0
    %v506 = vand.u32 %v61, 4294901760
    %507 = vmatpush1.msra.mxu0 %v506
    %508 = vmatprep.subr.mxu0 0.0
    %v509 = vand.u32 %v62, 4294901760
    %510 = vmatpush1.msra.mxu0 %v509
    %511 = vmatprep.subr.mxu0 0.0
    %512 = vmatpush1.msra.mxu0 0.0
    %513 = vmatprep.subr.mxu0 0.0
    %514 = vmatpush1.msra.mxu0 0.0
    %515 = vmatprep.subr.mxu0 0.0
    %516 = vmatpush1.msra.mxu0 0.0
    %517 = vmatprep.subr.mxu0 0.0
    %518 = vmatpush1.msra.mxu0 0.0
    %519 = vmatprep.subr.mxu0 0.0
    %520 = vmatpush1.msra.mxu0 0.0
    %521 = vmatprep.subr.mxu0 0.0
    %522 = vmatpush1.msra.mxu0 0.0
    %523 = vmatprep.subr.mxu0 0.0
    %524 = vmatpush1.msra.mxu0 0.0
    %525 = vmatprep.subr.mxu0 0.0
    %526 = vmatpush1.msra.mxu0 0.0
    %527 = vmatprep.subr.mxu0 0.0
    %528 = vmatpush1.msra.mxu0 0.0
    %529 = vmatprep.subr.mxu0 0.0
    %530 = vmatpush1.msra.mxu0 0.0
    %531 = vmatprep.subr.mxu0 0.0
    %532 = vmatpush1.msra.mxu0 0.0
    %533 = vmatprep.subr.mxu0 0.0
    %534 = vmatpush1.msra.mxu0 0.0
    %535 = vmatprep.subr.mxu0 0.0
    %536 = vmatpush1.msra.mxu0 0.0
    %537 = vmatprep.subr.mxu0 0.0
    %538 = vmatpush1.msra.mxu0 0.0
    %539 = vmatprep.subr.mxu0 0.0
    %540 = vmatpush1.msra.mxu0 0.0
    %541 = vmatprep.subr.mxu0 0.0
    %542 = vmatpush1.msra.mxu0 0.0
    %543 = vmatprep.mubr.f32.mxu0 0.0
    %v544 = vand.u32 %v441, 4294901760
    %v545 = vsub.f32 %v441, %v544
    %v546 = vand.u32 %v545, 4294901760
    %v547 = vsub.f32 %v545, %v546
    %v548 = vand.u32 %v547, 4294901760
    %549 = vmatmul.mubr.f32.gmra.mrb[0].mxu0 %v548
    %v550 = vpop.f32.mrb[0].mxu0
    %v551 = vadd.f32 %v461, %v550
    %v552 = vpop.f32.mrb[0].mxu0
    %553 = vmatprep.mubr.f32.mxu0 0.0
    %v554 = vand.u32 %v442, 4294901760
    %v555 = vsub.f32 %v442, %v554
    %v556 = vand.u32 %v555, 4294901760
    %v557 = vsub.f32 %v555, %v556
    %v558 = vand.u32 %v557, 4294901760
    %559 = vmatmul.mubr.f32.gmra.mrb[0].mxu0 %v558
    %v560 = vpop.f32.mrb[0].mxu0
    %v561 = vadd.f32 %v461, %v560
    %v562 = vpop.f32.mrb[0].mxu0
    %563 = vmatprep.mubr.f32.mxu0 0.0
    %v564 = vand.u32 %v443, 4294901760
    %v565 = vsub.f32 %v443, %v564
    %v566 = vand.u32 %v565, 4294901760
    %v567 = vsub.f32 %v565, %v566
    %v568 = vand.u32 %v567, 4294901760
    %569 = vmatmul.mubr.f32.gmra.mrb[0].mxu0 %v568
    %v570 = vpop.f32.mrb[0].mxu0
    %v571 = vadd.f32 %v461, %v570
    %v572 = vpop.f32.mrb[0].mxu0
    %573 = vmatprep.mubr.f32.mxu0 0.0
    %v574 = vand.u32 %v444, 4294901760
    %v575 = vsub.f32 %v444, %v574
    %v576 = vand.u32 %v575, 4294901760
    %v577 = vsub.f32 %v575, %v576
    %v578 = vand.u32 %v577, 4294901760
    %579 = vmatmul.mubr.f32.gmra.mrb[0].mxu0 %v578
    %v580 = vpop.f32.mrb[0].mxu0
    %v581 = vadd.f32 %v461, %v580
    %v582 = vpop.f32.mrb[0].mxu0
    %583 = vmatprep.mubr.f32.mxu0 0.0
    %v584 = vand.u32 %v445, 4294901760
    %v585 = vsub.f32 %v445, %v584
    %v586 = vand.u32 %v585, 4294901760
    %v587 = vsub.f32 %v585, %v586
    %v588 = vand.u32 %v587, 4294901760
    %589 = vmatmul.mubr.f32.gmra.mrb[0].mxu0 %v588
    %v590 = vpop.f32.mrb[0].mxu0
    %v591 = vadd.f32 %v461, %v590
    %v592 = vpop.f32.mrb[0].mxu0
    %593 = vmatprep.mubr.f32.mxu0 0.0
    %v594 = vand.u32 %v446, 4294901760
    %v595 = vsub.f32 %v446, %v594
    %v596 = vand.u32 %v595, 4294901760
    %v597 = vsub.f32 %v595, %v596
    %v598 = vand.u32 %v597, 4294901760
    %599 = vmatmul.mubr.f32.gmra.mrb[0].mxu0 %v598
    %v600 = vpop.f32.mrb[0].mxu0
    %v601 = vadd.f32 %v461, %v600
    %v602 = vpop.f32.mrb[0].mxu0
    %603 = vmatprep.mubr.f32.mxu0 0.0
    %v604 = vand.u32 %v447, 4294901760
    %v605 = vsub.f32 %v447, %v604
    %v606 = vand.u32 %v605, 4294901760
    %v607 = vsub.f32 %v605, %v606
    %v608 = vand.u32 %v607, 4294901760
    %609 = vmatmul.mubr.f32.gmra.mrb[0].mxu0 %v608
    %v610 = vpop.f32.mrb[0].mxu0
    %v611 = vadd.f32 %v461, %v610
    %v612 = vpop.f32.mrb[0].mxu0
    %613 = vmatprep.mubr.f32.mxu0 0.0
    %v614 = vand.u32 %v448, 4294901760
    %v615 = vsub.f32 %v448, %v614
    %v616 = vand.u32 %v615, 4294901760
    %v617 = vsub.f32 %v615, %v616
    %v618 = vand.u32 %v617, 4294901760
    %619 = vmatmul.mubr.f32.gmra.mrb[0].mxu0 %v618
    %v620 = vpop.f32.mrb[0].mxu0
    %v621 = vadd.f32 %v461, %v620
    %v622 = vpop.f32.mrb[0].mxu0
    %623 = vmatprep.mubr.f32.mxu0 0.0
    %v624 = vand.u32 %v449, 4294901760
    %v625 = vsub.f32 %v449, %v624
    %v626 = vand.u32 %v625, 4294901760
    %v627 = vsub.f32 %v625, %v626
    %v628 = vand.u32 %v627, 4294901760
    %629 = vmatmul.mubr.f32.gmra.mrb[0].mxu0 %v628
    %v630 = vpop.f32.mrb[0].mxu0
    %v631 = vadd.f32 %v461, %v630
    %v632 = vpop.f32.mrb[0].mxu0
    %633 = vmatprep.mubr.f32.mxu0 0.0
    %v634 = vand.u32 %v450, 4294901760
    %v635 = vsub.f32 %v450, %v634
    %v636 = vand.u32 %v635, 4294901760
    %v637 = vsub.f32 %v635, %v636
    %v638 = vand.u32 %v637, 4294901760
    %639 = vmatmul.mubr.f32.gmra.mrb[0].mxu0 %v638
    %v640 = vpop.f32.mrb[0].mxu0
    %v641 = vadd.f32 %v461, %v640
    %v642 = vpop.f32.mrb[0].mxu0
    %643 = vmatprep.mubr.f32.mxu0 0.0
    %v644 = vand.u32 %v451, 4294901760
    %v645 = vsub.f32 %v451, %v644
    %v646 = vand.u32 %v645, 4294901760
    %v647 = vsub.f32 %v645, %v646
    %v648 = vand.u32 %v647, 4294901760
    %649 = vmatmul.mubr.f32.gmra.mrb[0].mxu0 %v648
    %v650 = vpop.f32.mrb[0].mxu0
    %v651 = vadd.f32 %v461, %v650
    %v652 = vpop.f32.mrb[0].mxu0
    %653 = vmatprep.mubr.f32.mxu0 0.0
    %v654 = vand.u32 %v452, 4294901760
    %v655 = vsub.f32 %v452, %v654
    %v656 = vand.u32 %v655, 4294901760
    %v657 = vsub.f32 %v655, %v656
    %v658 = vand.u32 %v657, 4294901760
    %659 = vmatmul.mubr.f32.gmra.mrb[0].mxu0 %v658
    %v660 = vpop.f32.mrb[0].mxu0
    %v661 = vadd.f32 %v461, %v660
    %v662 = vpop.f32.mrb[0].mxu0
    %663 = vmatprep.mubr.f32.mxu0 0.0
    %v664 = vand.u32 %v453, 4294901760
    %v665 = vsub.f32 %v453, %v664
    %v666 = vand.u32 %v665, 4294901760
    %v667 = vsub.f32 %v665, %v666
    %v668 = vand.u32 %v667, 4294901760
    %669 = vmatmul.mubr.f32.gmra.mrb[0].mxu0 %v668
    %v670 = vpop.f32.mrb[0].mxu0
    %v671 = vadd.f32 %v461, %v670
    %v672 = vpop.f32.mrb[0].mxu0
    %673 = vmatprep.mubr.f32.mxu0 0.0
    %v674 = vand.u32 %v454, 4294901760
    %v675 = vsub.f32 %v454, %v674
    %v676 = vand.u32 %v675, 4294901760
    %v677 = vsub.f32 %v675, %v676
    %v678 = vand.u32 %v677, 4294901760
    %679 = vmatmul.mubr.f32.gmra.mrb[0].mxu0 %v678
    %v680 = vpop.f32.mrb[0].mxu0
    %v681 = vadd.f32 %v461, %v680
    %v682 = vpop.f32.mrb[0].mxu0
    %683 = vmatprep.mubr.f32.mxu0 0.0
    %v684 = vand.u32 %v455, 4294901760
    %v685 = vsub.f32 %v455, %v684
    %v686 = vand.u32 %v685, 4294901760
    %v687 = vsub.f32 %v685, %v686
    %v688 = vand.u32 %v687, 4294901760
    %689 = vmatmul.mubr.f32.gmra.mrb[0].mxu0 %v688
    %v690 = vpop.f32.mrb[0].mxu0
    %v691 = vadd.f32 %v461, %v690
    %v692 = vpop.f32.mrb[0].mxu0
    %693 = vmatprep.mubr.f32.mxu0 0.0
    %v694 = vand.u32 %v456, 4294901760
    %v695 = vsub.f32 %v456, %v694
    %v696 = vand.u32 %v695, 4294901760
    %v697 = vsub.f32 %v695, %v696
    %v698 = vand.u32 %v697, 4294901760
    %699 = vmatmul.mubr.f32.gmra.mrb[0].mxu0 %v698
    %v700 = vpop.f32.mrb[0].mxu0
    %v701 = vadd.f32 %v461, %v700
    %v702 = vpop.f32.mrb[0].mxu0
    %703 = vdwg.mxu0
    %704 = vmatprep.subr.mxu0 0.0
    %v705 = vand.u32 %v47, 4294901760
    %v706 = vsub.f32 %v47, %v705
    %v707 = vand.u32 %v706, 4294901760
    %v708 = vsub.f32 %v706, %v707
    %v709 = vand.u32 %v708, 4294901760
    %710 = vmatpush1.msra.mxu0 %v709
    %711 = vmatprep.subr.mxu0 0.0
    %v712 = vand.u32 %v48, 4294901760
    %v713 = vsub.f32 %v48, %v712
    %v714 = vand.u32 %v713, 4294901760
    %v715 = vsub.f32 %v713, %v714
    %v716 = vand.u32 %v715, 4294901760
    %717 = vmatpush1.msra.mxu0 %v716
    %718 = vmatprep.subr.mxu0 0.0
    %v719 = vand.u32 %v49, 4294901760
    %v720 = vsub.f32 %v49, %v719
    %v721 = vand.u32 %v720, 4294901760
    %v722 = vsub.f32 %v720, %v721
    %v723 = vand.u32 %v722, 4294901760
    %724 = vmatpush1.msra.mxu0 %v723
    %725 = vmatprep.subr.mxu0 0.0
    %v726 = vand.u32 %v50, 4294901760
    %v727 = vsub.f32 %v50, %v726
    %v728 = vand.u32 %v727, 4294901760
    %v729 = vsub.f32 %v727, %v728
    %v730 = vand.u32 %v729, 4294901760
    %731 = vmatpush1.msra.mxu0 %v730
    %732 = vmatprep.subr.mxu0 0.0
    %v733 = vand.u32 %v51, 4294901760
    %v734 = vsub.f32 %v51, %v733
    %v735 = vand.u32 %v734, 4294901760
    %v736 = vsub.f32 %v734, %v735
    %v737 = vand.u32 %v736, 4294901760
    %738 = vmatpush1.msra.mxu0 %v737
    %739 = vmatprep.subr.mxu0 0.0
    %v740 = vand.u32 %v52, 4294901760
    %v741 = vsub.f32 %v52, %v740
    %v742 = vand.u32 %v741, 4294901760
    %v743 = vsub.f32 %v741, %v742
    %v744 = vand.u32 %v743, 4294901760
    %745 = vmatpush1.msra.mxu0 %v744
    %746 = vmatprep.subr.mxu0 0.0
    %v747 = vand.u32 %v53, 4294901760
    %v748 = vsub.f32 %v53, %v747
    %v749 = vand.u32 %v748, 4294901760
    %v750 = vsub.f32 %v748, %v749
    %v751 = vand.u32 %v750, 4294901760
    %752 = vmatpush1.msra.mxu0 %v751
    %753 = vmatprep.subr.mxu0 0.0
    %v754 = vand.u32 %v54, 4294901760
    %v755 = vsub.f32 %v54, %v754
    %v756 = vand.u32 %v755, 4294901760
    %v757 = vsub.f32 %v755, %v756
    %v758 = vand.u32 %v757, 4294901760
    %759 = vmatpush1.msra.mxu0 %v758
    %760 = vmatprep.subr.mxu0 0.0
    %v761 = vand.u32 %v55, 4294901760
    %v762 = vsub.f32 %v55, %v761
    %v763 = vand.u32 %v762, 4294901760
    %v764 = vsub.f32 %v762, %v763
    %v765 = vand.u32 %v764, 4294901760
    %766 = vmatpush1.msra.mxu0 %v765
    %767 = vmatprep.subr.mxu0 0.0
    %v768 = vand.u32 %v56, 4294901760
    %v769 = vsub.f32 %v56, %v768
    %v770 = vand.u32 %v769, 4294901760
    %v771 = vsub.f32 %v769, %v770
    %v772 = vand.u32 %v771, 4294901760
    %773 = vmatpush1.msra.mxu0 %v772
    %774 = vmatprep.subr.mxu0 0.0
    %v775 = vand.u32 %v57, 4294901760
    %v776 = vsub.f32 %v57, %v775
    %v777 = vand.u32 %v776, 4294901760
    %v778 = vsub.f32 %v776, %v777
    %v779 = vand.u32 %v778, 4294901760
    %780 = vmatpush1.msra.mxu0 %v779
    %781 = vmatprep.subr.mxu0 0.0
    %v782 = vand.u32 %v58, 4294901760
    %v783 = vsub.f32 %v58, %v782
    %v784 = vand.u32 %v783, 4294901760
    %v785 = vsub.f32 %v783, %v784
    %v786 = vand.u32 %v785, 4294901760
    %787 = vmatpush1.msra.mxu0 %v786
    %788 = vmatprep.subr.mxu0 0.0
    %v789 = vand.u32 %v59, 4294901760
    %v790 = vsub.f32 %v59, %v789
    %v791 = vand.u32 %v790, 4294901760
    %v792 = vsub.f32 %v790, %v791
    %v793 = vand.u32 %v792, 4294901760
    %794 = vmatpush1.msra.mxu0 %v793
    %795 = vmatprep.subr.mxu0 0.0
    %v796 = vand.u32 %v60, 4294901760
    %v797 = vsub.f32 %v60, %v796
    %v798 = vand.u32 %v797, 4294901760
    %v799 = vsub.f32 %v797, %v798
    %v800 = vand.u32 %v799, 4294901760
    %801 = vmatpush1.msra.mxu0 %v800
    %802 = vmatprep.subr.mxu0 0.0
    %v803 = vand.u32 %v61, 4294901760
    %v804 = vsub.f32 %v61, %v803
    %v805 = vand.u32 %v804, 4294901760
    %v806 = vsub.f32 %v804, %v805
    %v807 = vand.u32 %v806, 4294901760
    %808 = vmatpush1.msra.mxu0 %v807
    %809 = vmatprep.subr.mxu0 0.0
    %v810 = vand.u32 %v62, 4294901760
    %v811 = vsub.f32 %v62, %v810
    %v812 = vand.u32 %v811, 4294901760
    %v813 = vsub.f32 %v811, %v812
    %v814 = vand.u32 %v813, 4294901760
    %815 = vmatpush1.msra.mxu0 %v814
    %816 = vmatprep.subr.mxu0 0.0
    %817 = vmatpush1.msra.mxu0 0.0
    %818 = vmatprep.subr.mxu0 0.0
    %819 = vmatpush1.msra.mxu0 0.0
    %820 = vmatprep.subr.mxu0 0.0
    %821 = vmatpush1.msra.mxu0 0.0
    %822 = vmatprep.subr.mxu0 0.0
    %823 = vmatpush1.msra.mxu0 0.0
    %824 = vmatprep.subr.mxu0 0.0
    %825 = vmatpush1.msra.mxu0 0.0
    %826 = vmatprep.subr.mxu0 0.0
    %827 = vmatpush1.msra.mxu0 0.0
    %828 = vmatprep.subr.mxu0 0.0
    %829 = vmatpush1.msra.mxu0 0.0
    %830 = vmatprep.subr.mxu0 0.0
    %831 = vmatpush1.msra.mxu0 0.0
    %832 = vmatprep.subr.mxu0 0.0
    %833 = vmatpush1.msra.mxu0 0.0
    %834 = vmatprep.subr.mxu0 0.0
    %835 = vmatpush1.msra.mxu0 0.0
    %836 = vmatprep.subr.mxu0 0.0
    %837 = vmatpush1.msra.mxu0 0.0
    %838 = vmatprep.subr.mxu0 0.0
    %839 = vmatpush1.msra.mxu0 0.0
    %840 = vmatprep.subr.mxu0 0.0
    %841 = vmatpush1.msra.mxu0 0.0
    %842 = vmatprep.subr.mxu0 0.0
    %843 = vmatpush1.msra.mxu0 0.0
    %844 = vmatprep.subr.mxu0 0.0
    %845 = vmatpush1.msra.mxu0 0.0
    %846 = vmatprep.subr.mxu0 0.0
    %847 = vmatpush1.msra.mxu0 0.0
    %848 = vmatprep.mubr.f32.mxu0 0.0
    %v849 = vand.u32 %v441, 4294901760
    %850 = vmatmul.mubr.f32.gmra.mrb[0].mxu0 %v849
    %v851 = vpop.f32.mrb[0].mxu0
    %v852 = vadd.f32 %v551, %v851
    %v853 = vpop.f32.mrb[0].mxu0
    %854 = vmatprep.mubr.f32.mxu0 0.0
    %v855 = vand.u32 %v442, 4294901760
    %856 = vmatmul.mubr.f32.gmra.mrb[0].mxu0 %v855
    %v857 = vpop.f32.mrb[0].mxu0
    %v858 = vadd.f32 %v561, %v857
    %v859 = vpop.f32.mrb[0].mxu0
    %860 = vmatprep.mubr.f32.mxu0 0.0
    %v861 = vand.u32 %v443, 4294901760
    %862 = vmatmul.mubr.f32.gmra.mrb[0].mxu0 %v861
    %v863 = vpop.f32.mrb[0].mxu0
    %v864 = vadd.f32 %v571, %v863
    %v865 = vpop.f32.mrb[0].mxu0
    %866 = vmatprep.mubr.f32.mxu0 0.0
    %v867 = vand.u32 %v444, 4294901760
    %868 = vmatmul.mubr.f32.gmra.mrb[0].mxu0 %v867
    %v869 = vpop.f32.mrb[0].mxu0
    %v870 = vadd.f32 %v581, %v869
    %v871 = vpop.f32.mrb[0].mxu0
    %872 = vmatprep.mubr.f32.mxu0 0.0
    %v873 = vand.u32 %v445, 4294901760
    %874 = vmatmul.mubr.f32.gmra.mrb[0].mxu0 %v873
    %v875 = vpop.f32.mrb[0].mxu0
    %v876 = vadd.f32 %v591, %v875
    %v877 = vpop.f32.mrb[0].mxu0
    %878 = vmatprep.mubr.f32.mxu0 0.0
    %v879 = vand.u32 %v446, 4294901760
    %880 = vmatmul.mubr.f32.gmra.mrb[0].mxu0 %v879
    %v881 = vpop.f32.mrb[0].mxu0
    %v882 = vadd.f32 %v601, %v881
    %v883 = vpop.f32.mrb[0].mxu0
    %884 = vmatprep.mubr.f32.mxu0 0.0
    %v885 = vand.u32 %v447, 4294901760
    %886 = vmatmul.mubr.f32.gmra.mrb[0].mxu0 %v885
    %v887 = vpop.f32.mrb[0].mxu0
    %v888 = vadd.f32 %v611, %v887
    %v889 = vpop.f32.mrb[0].mxu0
    %890 = vmatprep.mubr.f32.mxu0 0.0
    %v891 = vand.u32 %v448, 4294901760
    %892 = vmatmul.mubr.f32.gmra.mrb[0].mxu0 %v891
    %v893 = vpop.f32.mrb[0].mxu0
    %v894 = vadd.f32 %v621, %v893
    %v895 = vpop.f32.mrb[0].mxu0
    %896 = vmatprep.mubr.f32.mxu0 0.0
    %v897 = vand.u32 %v449, 4294901760
    %898 = vmatmul.mubr.f32.gmra.mrb[0].mxu0 %v897
    %v899 = vpop.f32.mrb[0].mxu0
    %v900 = vadd.f32 %v631, %v899
    %v901 = vpop.f32.mrb[0].mxu0
    %902 = vmatprep.mubr.f32.mxu0 0.0
    %v903 = vand.u32 %v450, 4294901760
    %904 = vmatmul.mubr.f32.gmra.mrb[0].mxu0 %v903
    %v905 = vpop.f32.mrb[0].mxu0
    %v906 = vadd.f32 %v641, %v905
    %v907 = vpop.f32.mrb[0].mxu0
    %908 = vmatprep.mubr.f32.mxu0 0.0
    %v909 = vand.u32 %v451, 4294901760
    %910 = vmatmul.mubr.f32.gmra.mrb[0].mxu0 %v909
    %v911 = vpop.f32.mrb[0].mxu0
    %v912 = vadd.f32 %v651, %v911
    %v913 = vpop.f32.mrb[0].mxu0
    %914 = vmatprep.mubr.f32.mxu0 0.0
    %v915 = vand.u32 %v452, 4294901760
    %916 = vmatmul.mubr.f32.gmra.mrb[0].mxu0 %v915
    %v917 = vpop.f32.mrb[0].mxu0
    %v918 = vadd.f32 %v661, %v917
    %v919 = vpop.f32.mrb[0].mxu0
    %920 = vmatprep.mubr.f32.mxu0 0.0
    %v921 = vand.u32 %v453, 4294901760
    %922 = vmatmul.mubr.f32.gmra.mrb[0].mxu0 %v921
    %v923 = vpop.f32.mrb[0].mxu0
    %v924 = vadd.f32 %v671, %v923
    %v925 = vpop.f32.mrb[0].mxu0
    %926 = vmatprep.mubr.f32.mxu0 0.0
    %v927 = vand.u32 %v454, 4294901760
    %928 = vmatmul.mubr.f32.gmra.mrb[0].mxu0 %v927
    %v929 = vpop.f32.mrb[0].mxu0
    %v930 = vadd.f32 %v681, %v929
    %v931 = vpop.f32.mrb[0].mxu0
    %932 = vmatprep.mubr.f32.mxu0 0.0
    %v933 = vand.u32 %v455, 4294901760
    %934 = vmatmul.mubr.f32.gmra.mrb[0].mxu0 %v933
    %v935 = vpop.f32.mrb[0].mxu0
    %v936 = vadd.f32 %v691, %v935
    %v937 = vpop.f32.mrb[0].mxu0
    %938 = vmatprep.mubr.f32.mxu0 0.0
    %v939 = vand.u32 %v456, 4294901760
    %940 = vmatmul.mubr.f32.gmra.mrb[0].mxu0 %v939
    %v941 = vpop.f32.mrb[0].mxu0
    %v942 = vadd.f32 %v701, %v941
    %v943 = vpop.f32.mrb[0].mxu0
    %944 = vdwg.mxu0
    %945 = vmatprep.subr.mxu0 0.0
    %v946 = vand.u32 %v47, 4294901760
    %v947 = vsub.f32 %v47, %v946
    %948 = vmatpush1.msra.mxu0 %v947
    %949 = vmatprep.subr.mxu0 0.0
    %v950 = vand.u32 %v48, 4294901760
    %v951 = vsub.f32 %v48, %v950
    %952 = vmatpush1.msra.mxu0 %v951
    %953 = vmatprep.subr.mxu0 0.0
    %v954 = vand.u32 %v49, 4294901760
    %v955 = vsub.f32 %v49, %v954
    %956 = vmatpush1.msra.mxu0 %v955
    %957 = vmatprep.subr.mxu0 0.0
    %v958 = vand.u32 %v50, 4294901760
    %v959 = vsub.f32 %v50, %v958
    %960 = vmatpush1.msra.mxu0 %v959
    %961 = vmatprep.subr.mxu0 0.0
    %v962 = vand.u32 %v51, 4294901760
    %v963 = vsub.f32 %v51, %v962
    %964 = vmatpush1.msra.mxu0 %v963
    %965 = vmatprep.subr.mxu0 0.0
    %v966 = vand.u32 %v52, 4294901760
    %v967 = vsub.f32 %v52, %v966
    %968 = vmatpush1.msra.mxu0 %v967
    %969 = vmatprep.subr.mxu0 0.0
    %v970 = vand.u32 %v53, 4294901760
    %v971 = vsub.f32 %v53, %v970
    %972 = vmatpush1.msra.mxu0 %v971
    %973 = vmatprep.subr.mxu0 0.0
    %v974 = vand.u32 %v54, 4294901760
    %v975 = vsub.f32 %v54, %v974
    %976 = vmatpush1.msra.mxu0 %v975
    %977 = vmatprep.subr.mxu0 0.0
    %v978 = vand.u32 %v55, 4294901760
    %v979 = vsub.f32 %v55, %v978
    %980 = vmatpush1.msra.mxu0 %v979
    %981 = vmatprep.subr.mxu0 0.0
    %v982 = vand.u32 %v56, 4294901760
    %v983 = vsub.f32 %v56, %v982
    %984 = vmatpush1.msra.mxu0 %v983
    %985 = vmatprep.subr.mxu0 0.0
    %v986 = vand.u32 %v57, 4294901760
    %v987 = vsub.f32 %v57, %v986
    %988 = vmatpush1.msra.mxu0 %v987
    %989 = vmatprep.subr.mxu0 0.0
    %v990 = vand.u32 %v58, 4294901760
    %v991 = vsub.f32 %v58, %v990
    %992 = vmatpush1.msra.mxu0 %v991
    %993 = vmatprep.subr.mxu0 0.0
    %v994 = vand.u32 %v59, 4294901760
    %v995 = vsub.f32 %v59, %v994
    %996 = vmatpush1.msra.mxu0 %v995
    %997 = vmatprep.subr.mxu0 0.0
    %v998 = vand.u32 %v60, 4294901760
    %v999 = vsub.f32 %v60, %v998
    %1000 = vmatpush1.msra.mxu0 %v999
    %1001 = vmatprep.subr.mxu0 0.0
    %v1002 = vand.u32 %v61, 4294901760
    %v1003 = vsub.f32 %v61, %v1002
    %1004 = vmatpush1.msra.mxu0 %v1003
    %1005 = vmatprep.subr.mxu0 0.0
    %v1006 = vand.u32 %v62, 4294901760
    %v1007 = vsub.f32 %v62, %v1006
    %1008 = vmatpush1.msra.mxu0 %v1007
    %1009 = vmatprep.subr.mxu0 0.0
    %1010 = vmatpush1.msra.mxu0 0.0
    %1011 = vmatprep.subr.mxu0 0.0
    %1012 = vmatpush1.msra.mxu0 0.0
    %1013 = vmatprep.subr.mxu0 0.0
    %1014 = vmatpush1.msra.mxu0 0.0
    %1015 = vmatprep.subr.mxu0 0.0
    %1016 = vmatpush1.msra.mxu0 0.0
    %1017 = vmatprep.subr.mxu0 0.0
    %1018 = vmatpush1.msra.mxu0 0.0
    %1019 = vmatprep.subr.mxu0 0.0
    %1020 = vmatpush1.msra.mxu0 0.0
    %1021 = vmatprep.subr.mxu0 0.0
    %1022 = vmatpush1.msra.mxu0 0.0
    %1023 = vmatprep.subr.mxu0 0.0
    %1024 = vmatpush1.msra.mxu0 0.0
    %1025 = vmatprep.subr.mxu0 0.0
    %1026 = vmatpush1.msra.mxu0 0.0
    %1027 = vmatprep.subr.mxu0 0.0
    %1028 = vmatpush1.msra.mxu0 0.0
    %1029 = vmatprep.subr.mxu0 0.0
    %1030 = vmatpush1.msra.mxu0 0.0
    %1031 = vmatprep.subr.mxu0 0.0
    %1032 = vmatpush1.msra.mxu0 0.0
    %1033 = vmatprep.subr.mxu0 0.0
    %1034 = vmatpush1.msra.mxu0 0.0
    %1035 = vmatprep.subr.mxu0 0.0
    %1036 = vmatpush1.msra.mxu0 0.0
    %1037 = vmatprep.subr.mxu0 0.0
    %1038 = vmatpush1.msra.mxu0 0.0
    %1039 = vmatprep.subr.mxu0 0.0
    %1040 = vmatpush1.msra.mxu0 0.0
    %1041 = vmatprep.mubr.f32.mxu0 0.0
    %v1042 = vand.u32 %v441, 4294901760
    %v1043 = vsub.f32 %v441, %v1042
    %1044 = vmatmul.mubr.f32.gmra.mrb[0].mxu0 %v1043
    %v1045 = vpop.f32.mrb[0].mxu0
    %v1046 = vadd.f32 %v852, %v1045
    %v1047 = vpop.f32.mrb[0].mxu0
    %1048 = vmatprep.mubr.f32.mxu0 0.0
    %v1049 = vand.u32 %v442, 4294901760
    %v1050 = vsub.f32 %v442, %v1049
    %1051 = vmatmul.mubr.f32.gmra.mrb[0].mxu0 %v1050
    %v1052 = vpop.f32.mrb[0].mxu0
    %v1053 = vadd.f32 %v858, %v1052
    %v1054 = vpop.f32.mrb[0].mxu0
    %1055 = vmatprep.mubr.f32.mxu0 0.0
    %v1056 = vand.u32 %v443, 4294901760
    %v1057 = vsub.f32 %v443, %v1056
    %1058 = vmatmul.mubr.f32.gmra.mrb[0].mxu0 %v1057
    %v1059 = vpop.f32.mrb[0].mxu0
    %v1060 = vadd.f32 %v864, %v1059
    %v1061 = vpop.f32.mrb[0].mxu0
    %1062 = vmatprep.mubr.f32.mxu0 0.0
    %v1063 = vand.u32 %v444, 4294901760
    %v1064 = vsub.f32 %v444, %v1063
    %1065 = vmatmul.mubr.f32.gmra.mrb[0].mxu0 %v1064
    %v1066 = vpop.f32.mrb[0].mxu0
    %v1067 = vadd.f32 %v870, %v1066
    %v1068 = vpop.f32.mrb[0].mxu0
    %1069 = vmatprep.mubr.f32.mxu0 0.0
    %v1070 = vand.u32 %v445, 4294901760
    %v1071 = vsub.f32 %v445, %v1070
    %1072 = vmatmul.mubr.f32.gmra.mrb[0].mxu0 %v1071
    %v1073 = vpop.f32.mrb[0].mxu0
    %v1074 = vadd.f32 %v876, %v1073
    %v1075 = vpop.f32.mrb[0].mxu0
    %1076 = vmatprep.mubr.f32.mxu0 0.0
    %v1077 = vand.u32 %v446, 4294901760
    %v1078 = vsub.f32 %v446, %v1077
    %1079 = vmatmul.mubr.f32.gmra.mrb[0].mxu0 %v1078
    %v1080 = vpop.f32.mrb[0].mxu0
    %v1081 = vadd.f32 %v882, %v1080
    %v1082 = vpop.f32.mrb[0].mxu0
    %1083 = vmatprep.mubr.f32.mxu0 0.0
    %v1084 = vand.u32 %v447, 4294901760
    %v1085 = vsub.f32 %v447, %v1084
    %1086 = vmatmul.mubr.f32.gmra.mrb[0].mxu0 %v1085
    %v1087 = vpop.f32.mrb[0].mxu0
    %v1088 = vadd.f32 %v888, %v1087
    %v1089 = vpop.f32.mrb[0].mxu0
    %1090 = vmatprep.mubr.f32.mxu0 0.0
    %v1091 = vand.u32 %v448, 4294901760
    %v1092 = vsub.f32 %v448, %v1091
    %1093 = vmatmul.mubr.f32.gmra.mrb[0].mxu0 %v1092
    %v1094 = vpop.f32.mrb[0].mxu0
    %v1095 = vadd.f32 %v894, %v1094
    %v1096 = vpop.f32.mrb[0].mxu0
    %1097 = vmatprep.mubr.f32.mxu0 0.0
    %v1098 = vand.u32 %v449, 4294901760
    %v1099 = vsub.f32 %v449, %v1098
    %1100 = vmatmul.mubr.f32.gmra.mrb[0].mxu0 %v1099
    %v1101 = vpop.f32.mrb[0].mxu0
    %v1102 = vadd.f32 %v900, %v1101
    %v1103 = vpop.f32.mrb[0].mxu0
    %1104 = vmatprep.mubr.f32.mxu0 0.0
    %v1105 = vand.u32 %v450, 4294901760
    %v1106 = vsub.f32 %v450, %v1105
    %1107 = vmatmul.mubr.f32.gmra.mrb[0].mxu0 %v1106
    %v1108 = vpop.f32.mrb[0].mxu0
    %v1109 = vadd.f32 %v906, %v1108
    %v1110 = vpop.f32.mrb[0].mxu0
    %1111 = vmatprep.mubr.f32.mxu0 0.0
    %v1112 = vand.u32 %v451, 4294901760
    %v1113 = vsub.f32 %v451, %v1112
    %1114 = vmatmul.mubr.f32.gmra.mrb[0].mxu0 %v1113
    %v1115 = vpop.f32.mrb[0].mxu0
    %v1116 = vadd.f32 %v912, %v1115
    %v1117 = vpop.f32.mrb[0].mxu0
    %1118 = vmatprep.mubr.f32.mxu0 0.0
    %v1119 = vand.u32 %v452, 4294901760
    %v1120 = vsub.f32 %v452, %v1119
    %1121 = vmatmul.mubr.f32.gmra.mrb[0].mxu0 %v1120
    %v1122 = vpop.f32.mrb[0].mxu0
    %v1123 = vadd.f32 %v918, %v1122
    %v1124 = vpop.f32.mrb[0].mxu0
    %1125 = vmatprep.mubr.f32.mxu0 0.0
    %v1126 = vand.u32 %v453, 4294901760
    %v1127 = vsub.f32 %v453, %v1126
    %1128 = vmatmul.mubr.f32.gmra.mrb[0].mxu0 %v1127
    %v1129 = vpop.f32.mrb[0].mxu0
    %v1130 = vadd.f32 %v924, %v1129
    %v1131 = vpop.f32.mrb[0].mxu0
    %1132 = vmatprep.mubr.f32.mxu0 0.0
    %v1133 = vand.u32 %v454, 4294901760
    %v1134 = vsub.f32 %v454, %v1133
    %1135 = vmatmul.mubr.f32.gmra.mrb[0].mxu0 %v1134
    %v1136 = vpop.f32.mrb[0].mxu0
    %v1137 = vadd.f32 %v930, %v1136
    %v1138 = vpop.f32.mrb[0].mxu0
    %1139 = vmatprep.mubr.f32.mxu0 0.0
    %v1140 = vand.u32 %v455, 4294901760
    %v1141 = vsub.f32 %v455, %v1140
    %1142 = vmatmul.mubr.f32.gmra.mrb[0].mxu0 %v1141
    %v1143 = vpop.f32.mrb[0].mxu0
    %v1144 = vadd.f32 %v936, %v1143
    %v1145 = vpop.f32.mrb[0].mxu0
    %1146 = vmatprep.mubr.f32.mxu0 0.0
    %v1147 = vand.u32 %v456, 4294901760
    %v1148 = vsub.f32 %v456, %v1147
    %1149 = vmatmul.mubr.f32.gmra.mrb[0].mxu0 %v1148
    %v1150 = vpop.f32.mrb[0].mxu0
    %v1151 = vadd.f32 %v942, %v1150
    %v1152 = vpop.f32.mrb[0].mxu0
    %1153 = vdwg.mxu0
    %1154 = vmatprep.subr.mxu0 0.0
    %v1155 = vand.u32 %v47, 4294901760
    %1156 = vmatpush1.msra.mxu0 %v1155
    %1157 = vmatprep.subr.mxu0 0.0
    %v1158 = vand.u32 %v48, 4294901760
    %1159 = vmatpush1.msra.mxu0 %v1158
    %1160 = vmatprep.subr.mxu0 0.0
    %v1161 = vand.u32 %v49, 4294901760
    %1162 = vmatpush1.msra.mxu0 %v1161
    %1163 = vmatprep.subr.mxu0 0.0
    %v1164 = vand.u32 %v50, 4294901760
    %1165 = vmatpush1.msra.mxu0 %v1164
    %1166 = vmatprep.subr.mxu0 0.0
    %v1167 = vand.u32 %v51, 4294901760
    %1168 = vmatpush1.msra.mxu0 %v1167
    %1169 = vmatprep.subr.mxu0 0.0
    %v1170 = vand.u32 %v52, 4294901760
    %1171 = vmatpush1.msra.mxu0 %v1170
    %1172 = vmatprep.subr.mxu0 0.0
    %v1173 = vand.u32 %v53, 4294901760
    %1174 = vmatpush1.msra.mxu0 %v1173
    %1175 = vmatprep.subr.mxu0 0.0
    %v1176 = vand.u32 %v54, 4294901760
    %1177 = vmatpush1.msra.mxu0 %v1176
    %1178 = vmatprep.subr.mxu0 0.0
    %v1179 = vand.u32 %v55, 4294901760
    %1180 = vmatpush1.msra.mxu0 %v1179
    %1181 = vmatprep.subr.mxu0 0.0
    %v1182 = vand.u32 %v56, 4294901760
    %1183 = vmatpush1.msra.mxu0 %v1182
    %1184 = vmatprep.subr.mxu0 0.0
    %v1185 = vand.u32 %v57, 4294901760
    %1186 = vmatpush1.msra.mxu0 %v1185
    %1187 = vmatprep.subr.mxu0 0.0
    %v1188 = vand.u32 %v58, 4294901760
    %1189 = vmatpush1.msra.mxu0 %v1188
    %1190 = vmatprep.subr.mxu0 0.0
    %v1191 = vand.u32 %v59, 4294901760
    %1192 = vmatpush1.msra.mxu0 %v1191
    %1193 = vmatprep.subr.mxu0 0.0
    %v1194 = vand.u32 %v60, 4294901760
    %1195 = vmatpush1.msra.mxu0 %v1194
    %1196 = vmatprep.subr.mxu0 0.0
    %v1197 = vand.u32 %v61, 4294901760
    %1198 = vmatpush1.msra.mxu0 %v1197
    %1199 = vmatprep.subr.mxu0 0.0
    %v1200 = vand.u32 %v62, 4294901760
    %1201 = vmatpush1.msra.mxu0 %v1200
    %1202 = vmatprep.subr.mxu0 0.0
    %1203 = vmatpush1.msra.mxu0 0.0
    %1204 = vmatprep.subr.mxu0 0.0
    %1205 = vmatpush1.msra.mxu0 0.0
    %1206 = vmatprep.subr.mxu0 0.0
    %1207 = vmatpush1.msra.mxu0 0.0
    %1208 = vmatprep.subr.mxu0 0.0
    %1209 = vmatpush1.msra.mxu0 0.0
    %1210 = vmatprep.subr.mxu0 0.0
    %1211 = vmatpush1.msra.mxu0 0.0
    %1212 = vmatprep.subr.mxu0 0.0
    %1213 = vmatpush1.msra.mxu0 0.0
    %1214 = vmatprep.subr.mxu0 0.0
    %1215 = vmatpush1.msra.mxu0 0.0
    %1216 = vmatprep.subr.mxu0 0.0
    %1217 = vmatpush1.msra.mxu0 0.0
    %1218 = vmatprep.subr.mxu0 0.0
    %1219 = vmatpush1.msra.mxu0 0.0
    %1220 = vmatprep.subr.mxu0 0.0
    %1221 = vmatpush1.msra.mxu0 0.0
    %1222 = vmatprep.subr.mxu0 0.0
    %1223 = vmatpush1.msra.mxu0 0.0
    %1224 = vmatprep.subr.mxu0 0.0
    %1225 = vmatpush1.msra.mxu0 0.0
    %1226 = vmatprep.subr.mxu0 0.0
    %1227 = vmatpush1.msra.mxu0 0.0
    %1228 = vmatprep.subr.mxu0 0.0
    %1229 = vmatpush1.msra.mxu0 0.0
    %1230 = vmatprep.subr.mxu0 0.0
    %1231 = vmatpush1.msra.mxu0 0.0
    %1232 = vmatprep.subr.mxu0 0.0
    %1233 = vmatpush1.msra.mxu0 0.0
    %1234 = vmatprep.mubr.f32.mxu0 0.0
    %v1235 = vand.u32 %v441, 4294901760
    %v1236 = vsub.f32 %v441, %v1235
    %v1237 = vand.u32 %v1236, 4294901760
    %1238 = vmatmul.mubr.f32.gmra.mrb[0].mxu0 %v1237
    %v1239 = vpop.f32.mrb[0].mxu0
    %v1240 = vadd.f32 %v1046, %v1239
    %v1241 = vpop.f32.mrb[0].mxu0
    %1242 = vmatprep.mubr.f32.mxu0 0.0
    %v1243 = vand.u32 %v442, 4294901760
    %v1244 = vsub.f32 %v442, %v1243
    %v1245 = vand.u32 %v1244, 4294901760
    %1246 = vmatmul.mubr.f32.gmra.mrb[0].mxu0 %v1245
    %v1247 = vpop.f32.mrb[0].mxu0
    %v1248 = vadd.f32 %v1053, %v1247
    %v1249 = vpop.f32.mrb[0].mxu0
    %1250 = vmatprep.mubr.f32.mxu0 0.0
    %v1251 = vand.u32 %v443, 4294901760
    %v1252 = vsub.f32 %v443, %v1251
    %v1253 = vand.u32 %v1252, 4294901760
    %1254 = vmatmul.mubr.f32.gmra.mrb[0].mxu0 %v1253
    %v1255 = vpop.f32.mrb[0].mxu0
    %v1256 = vadd.f32 %v1060, %v1255
    %v1257 = vpop.f32.mrb[0].mxu0
    %1258 = vmatprep.mubr.f32.mxu0 0.0
    %v1259 = vand.u32 %v444, 4294901760
    %v1260 = vsub.f32 %v444, %v1259
    %v1261 = vand.u32 %v1260, 4294901760
    %1262 = vmatmul.mubr.f32.gmra.mrb[0].mxu0 %v1261
    %v1263 = vpop.f32.mrb[0].mxu0
    %v1264 = vadd.f32 %v1067, %v1263
    %v1265 = vpop.f32.mrb[0].mxu0
    %1266 = vmatprep.mubr.f32.mxu0 0.0
    %v1267 = vand.u32 %v445, 4294901760
    %v1268 = vsub.f32 %v445, %v1267
    %v1269 = vand.u32 %v1268, 4294901760
    %1270 = vmatmul.mubr.f32.gmra.mrb[0].mxu0 %v1269
    %v1271 = vpop.f32.mrb[0].mxu0
    %v1272 = vadd.f32 %v1074, %v1271
    %v1273 = vpop.f32.mrb[0].mxu0
    %1274 = vmatprep.mubr.f32.mxu0 0.0
    %v1275 = vand.u32 %v446, 4294901760
    %v1276 = vsub.f32 %v446, %v1275
    %v1277 = vand.u32 %v1276, 4294901760
    %1278 = vmatmul.mubr.f32.gmra.mrb[0].mxu0 %v1277
    %v1279 = vpop.f32.mrb[0].mxu0
    %v1280 = vadd.f32 %v1081, %v1279
    %v1281 = vpop.f32.mrb[0].mxu0
    %1282 = vmatprep.mubr.f32.mxu0 0.0
    %v1283 = vand.u32 %v447, 4294901760
    %v1284 = vsub.f32 %v447, %v1283
    %v1285 = vand.u32 %v1284, 4294901760
    %1286 = vmatmul.mubr.f32.gmra.mrb[0].mxu0 %v1285
    %v1287 = vpop.f32.mrb[0].mxu0
    %v1288 = vadd.f32 %v1088, %v1287
    %v1289 = vpop.f32.mrb[0].mxu0
    %1290 = vmatprep.mubr.f32.mxu0 0.0
    %v1291 = vand.u32 %v448, 4294901760
    %v1292 = vsub.f32 %v448, %v1291
    %v1293 = vand.u32 %v1292, 4294901760
    %1294 = vmatmul.mubr.f32.gmra.mrb[0].mxu0 %v1293
    %v1295 = vpop.f32.mrb[0].mxu0
    %v1296 = vadd.f32 %v1095, %v1295
    %v1297 = vpop.f32.mrb[0].mxu0
    %1298 = vmatprep.mubr.f32.mxu0 0.0
    %v1299 = vand.u32 %v449, 4294901760
    %v1300 = vsub.f32 %v449, %v1299
    %v1301 = vand.u32 %v1300, 4294901760
    %1302 = vmatmul.mubr.f32.gmra.mrb[0].mxu0 %v1301
    %v1303 = vpop.f32.mrb[0].mxu0
    %v1304 = vadd.f32 %v1102, %v1303
    %v1305 = vpop.f32.mrb[0].mxu0
    %1306 = vmatprep.mubr.f32.mxu0 0.0
    %v1307 = vand.u32 %v450, 4294901760
    %v1308 = vsub.f32 %v450, %v1307
    %v1309 = vand.u32 %v1308, 4294901760
    %1310 = vmatmul.mubr.f32.gmra.mrb[0].mxu0 %v1309
    %v1311 = vpop.f32.mrb[0].mxu0
    %v1312 = vadd.f32 %v1109, %v1311
    %v1313 = vpop.f32.mrb[0].mxu0
    %1314 = vmatprep.mubr.f32.mxu0 0.0
    %v1315 = vand.u32 %v451, 4294901760
    %v1316 = vsub.f32 %v451, %v1315
    %v1317 = vand.u32 %v1316, 4294901760
    %1318 = vmatmul.mubr.f32.gmra.mrb[0].mxu0 %v1317
    %v1319 = vpop.f32.mrb[0].mxu0
    %v1320 = vadd.f32 %v1116, %v1319
    %v1321 = vpop.f32.mrb[0].mxu0
    %1322 = vmatprep.mubr.f32.mxu0 0.0
    %v1323 = vand.u32 %v452, 4294901760
    %v1324 = vsub.f32 %v452, %v1323
    %v1325 = vand.u32 %v1324, 4294901760
    %1326 = vmatmul.mubr.f32.gmra.mrb[0].mxu0 %v1325
    %v1327 = vpop.f32.mrb[0].mxu0
    %v1328 = vadd.f32 %v1123, %v1327
    %v1329 = vpop.f32.mrb[0].mxu0
    %1330 = vmatprep.mubr.f32.mxu0 0.0
    %v1331 = vand.u32 %v453, 4294901760
    %v1332 = vsub.f32 %v453, %v1331
    %v1333 = vand.u32 %v1332, 4294901760
    %1334 = vmatmul.mubr.f32.gmra.mrb[0].mxu0 %v1333
    %v1335 = vpop.f32.mrb[0].mxu0
    %v1336 = vadd.f32 %v1130, %v1335
    %v1337 = vpop.f32.mrb[0].mxu0
    %1338 = vmatprep.mubr.f32.mxu0 0.0
    %v1339 = vand.u32 %v454, 4294901760
    %v1340 = vsub.f32 %v454, %v1339
    %v1341 = vand.u32 %v1340, 4294901760
    %1342 = vmatmul.mubr.f32.gmra.mrb[0].mxu0 %v1341
    %v1343 = vpop.f32.mrb[0].mxu0
    %v1344 = vadd.f32 %v1137, %v1343
    %v1345 = vpop.f32.mrb[0].mxu0
    %1346 = vmatprep.mubr.f32.mxu0 0.0
    %v1347 = vand.u32 %v455, 4294901760
    %v1348 = vsub.f32 %v455, %v1347
    %v1349 = vand.u32 %v1348, 4294901760
    %1350 = vmatmul.mubr.f32.gmra.mrb[0].mxu0 %v1349
    %v1351 = vpop.f32.mrb[0].mxu0
    %v1352 = vadd.f32 %v1144, %v1351
    %v1353 = vpop.f32.mrb[0].mxu0
    %1354 = vmatprep.mubr.f32.mxu0 0.0
    %v1355 = vand.u32 %v456, 4294901760
    %v1356 = vsub.f32 %v456, %v1355
    %v1357 = vand.u32 %v1356, 4294901760
    %1358 = vmatmul.mubr.f32.gmra.mrb[0].mxu0 %v1357
    %v1359 = vpop.f32.mrb[0].mxu0
    %v1360 = vadd.f32 %v1151, %v1359
    %v1361 = vpop.f32.mrb[0].mxu0
    %1362 = vdwg.mxu0
    %1363 = vmatprep.subr.mxu0 0.0
    %v1364 = vand.u32 %v47, 4294901760
    %v1365 = vsub.f32 %v47, %v1364
    %v1366 = vand.u32 %v1365, 4294901760
    %1367 = vmatpush1.msra.mxu0 %v1366
    %1368 = vmatprep.subr.mxu0 0.0
    %v1369 = vand.u32 %v48, 4294901760
    %v1370 = vsub.f32 %v48, %v1369
    %v1371 = vand.u32 %v1370, 4294901760
    %1372 = vmatpush1.msra.mxu0 %v1371
    %1373 = vmatprep.subr.mxu0 0.0
    %v1374 = vand.u32 %v49, 4294901760
    %v1375 = vsub.f32 %v49, %v1374
    %v1376 = vand.u32 %v1375, 4294901760
    %1377 = vmatpush1.msra.mxu0 %v1376
    %1378 = vmatprep.subr.mxu0 0.0
    %v1379 = vand.u32 %v50, 4294901760
    %v1380 = vsub.f32 %v50, %v1379
    %v1381 = vand.u32 %v1380, 4294901760
    %1382 = vmatpush1.msra.mxu0 %v1381
    %1383 = vmatprep.subr.mxu0 0.0
    %v1384 = vand.u32 %v51, 4294901760
    %v1385 = vsub.f32 %v51, %v1384
    %v1386 = vand.u32 %v1385, 4294901760
    %1387 = vmatpush1.msra.mxu0 %v1386
    %1388 = vmatprep.subr.mxu0 0.0
    %v1389 = vand.u32 %v52, 4294901760
    %v1390 = vsub.f32 %v52, %v1389
    %v1391 = vand.u32 %v1390, 4294901760
    %1392 = vmatpush1.msra.mxu0 %v1391
    %1393 = vmatprep.subr.mxu0 0.0
    %v1394 = vand.u32 %v53, 4294901760
    %v1395 = vsub.f32 %v53, %v1394
    %v1396 = vand.u32 %v1395, 4294901760
    %1397 = vmatpush1.msra.mxu0 %v1396
    %1398 = vmatprep.subr.mxu0 0.0
    %v1399 = vand.u32 %v54, 4294901760
    %v1400 = vsub.f32 %v54, %v1399
    %v1401 = vand.u32 %v1400, 4294901760
    %1402 = vmatpush1.msra.mxu0 %v1401
    %1403 = vmatprep.subr.mxu0 0.0
    %v1404 = vand.u32 %v55, 4294901760
    %v1405 = vsub.f32 %v55, %v1404
    %v1406 = vand.u32 %v1405, 4294901760
    %1407 = vmatpush1.msra.mxu0 %v1406
    %1408 = vmatprep.subr.mxu0 0.0
    %v1409 = vand.u32 %v56, 4294901760
    %v1410 = vsub.f32 %v56, %v1409
    %v1411 = vand.u32 %v1410, 4294901760
    %1412 = vmatpush1.msra.mxu0 %v1411
    %1413 = vmatprep.subr.mxu0 0.0
    %v1414 = vand.u32 %v57, 4294901760
    %v1415 = vsub.f32 %v57, %v1414
    %v1416 = vand.u32 %v1415, 4294901760
    %1417 = vmatpush1.msra.mxu0 %v1416
    %1418 = vmatprep.subr.mxu0 0.0
    %v1419 = vand.u32 %v58, 4294901760
    %v1420 = vsub.f32 %v58, %v1419
    %v1421 = vand.u32 %v1420, 4294901760
    %1422 = vmatpush1.msra.mxu0 %v1421
    %1423 = vmatprep.subr.mxu0 0.0
    %v1424 = vand.u32 %v59, 4294901760
    %v1425 = vsub.f32 %v59, %v1424
    %v1426 = vand.u32 %v1425, 4294901760
    %1427 = vmatpush1.msra.mxu0 %v1426
    %1428 = vmatprep.subr.mxu0 0.0
    %v1429 = vand.u32 %v60, 4294901760
    %v1430 = vsub.f32 %v60, %v1429
    %v1431 = vand.u32 %v1430, 4294901760
    %1432 = vmatpush1.msra.mxu0 %v1431
    %1433 = vmatprep.subr.mxu0 0.0
    %v1434 = vand.u32 %v61, 4294901760
    %v1435 = vsub.f32 %v61, %v1434
    %v1436 = vand.u32 %v1435, 4294901760
    %1437 = vmatpush1.msra.mxu0 %v1436
    %1438 = vmatprep.subr.mxu0 0.0
    %v1439 = vand.u32 %v62, 4294901760
    %v1440 = vsub.f32 %v62, %v1439
    %v1441 = vand.u32 %v1440, 4294901760
    %1442 = vmatpush1.msra.mxu0 %v1441
    %1443 = vmatprep.subr.mxu0 0.0
    %1444 = vmatpush1.msra.mxu0 0.0
    %1445 = vmatprep.subr.mxu0 0.0
    %1446 = vmatpush1.msra.mxu0 0.0
    %1447 = vmatprep.subr.mxu0 0.0
    %1448 = vmatpush1.msra.mxu0 0.0
    %1449 = vmatprep.subr.mxu0 0.0
    %1450 = vmatpush1.msra.mxu0 0.0
    %1451 = vmatprep.subr.mxu0 0.0
    %1452 = vmatpush1.msra.mxu0 0.0
    %1453 = vmatprep.subr.mxu0 0.0
    %1454 = vmatpush1.msra.mxu0 0.0
    %1455 = vmatprep.subr.mxu0 0.0
    %1456 = vmatpush1.msra.mxu0 0.0
    %1457 = vmatprep.subr.mxu0 0.0
    %1458 = vmatpush1.msra.mxu0 0.0
    %1459 = vmatprep.subr.mxu0 0.0
    %1460 = vmatpush1.msra.mxu0 0.0
    %1461 = vmatprep.subr.mxu0 0.0
    %1462 = vmatpush1.msra.mxu0 0.0
    %1463 = vmatprep.subr.mxu0 0.0
    %1464 = vmatpush1.msra.mxu0 0.0
    %1465 = vmatprep.subr.mxu0 0.0
    %1466 = vmatpush1.msra.mxu0 0.0
    %1467 = vmatprep.subr.mxu0 0.0
    %1468 = vmatpush1.msra.mxu0 0.0
    %1469 = vmatprep.subr.mxu0 0.0
    %1470 = vmatpush1.msra.mxu0 0.0
    %1471 = vmatprep.subr.mxu0 0.0
    %1472 = vmatpush1.msra.mxu0 0.0
    %1473 = vmatprep.subr.mxu0 0.0
    %1474 = vmatpush1.msra.mxu0 0.0
    %1475 = vmatprep.mubr.f32.mxu0 0.0
    %v1476 = vand.u32 %v441, 4294901760
    %1477 = vmatmul.mubr.f32.gmra.mrb[0].mxu0 %v1476
    %v1478 = vpop.f32.mrb[0].mxu0
    %v1479 = vadd.f32 %v1240, %v1478
    %v1480 = vpop.f32.mrb[0].mxu0
    %1481 = vmatprep.mubr.f32.mxu0 0.0
    %v1482 = vand.u32 %v442, 4294901760
    %1483 = vmatmul.mubr.f32.gmra.mrb[0].mxu0 %v1482
    %v1484 = vpop.f32.mrb[0].mxu0
    %v1485 = vadd.f32 %v1248, %v1484
    %v1486 = vpop.f32.mrb[0].mxu0
    %1487 = vmatprep.mubr.f32.mxu0 0.0
    %v1488 = vand.u32 %v443, 4294901760
    %1489 = vmatmul.mubr.f32.gmra.mrb[0].mxu0 %v1488
    %v1490 = vpop.f32.mrb[0].mxu0
    %v1491 = vadd.f32 %v1256, %v1490
    %v1492 = vpop.f32.mrb[0].mxu0
    %1493 = vmatprep.mubr.f32.mxu0 0.0
    %v1494 = vand.u32 %v444, 4294901760
    %1495 = vmatmul.mubr.f32.gmra.mrb[0].mxu0 %v1494
    %v1496 = vpop.f32.mrb[0].mxu0
    %v1497 = vadd.f32 %v1264, %v1496
    %v1498 = vpop.f32.mrb[0].mxu0
    %1499 = vmatprep.mubr.f32.mxu0 0.0
    %v1500 = vand.u32 %v445, 4294901760
    %1501 = vmatmul.mubr.f32.gmra.mrb[0].mxu0 %v1500
    %v1502 = vpop.f32.mrb[0].mxu0
    %v1503 = vadd.f32 %v1272, %v1502
    %v1504 = vpop.f32.mrb[0].mxu0
    %1505 = vmatprep.mubr.f32.mxu0 0.0
    %v1506 = vand.u32 %v446, 4294901760
    %1507 = vmatmul.mubr.f32.gmra.mrb[0].mxu0 %v1506
    %v1508 = vpop.f32.mrb[0].mxu0
    %v1509 = vadd.f32 %v1280, %v1508
    %v1510 = vpop.f32.mrb[0].mxu0
    %1511 = vmatprep.mubr.f32.mxu0 0.0
    %v1512 = vand.u32 %v447, 4294901760
    %1513 = vmatmul.mubr.f32.gmra.mrb[0].mxu0 %v1512
    %v1514 = vpop.f32.mrb[0].mxu0
    %v1515 = vadd.f32 %v1288, %v1514
    %v1516 = vpop.f32.mrb[0].mxu0
    %1517 = vmatprep.mubr.f32.mxu0 0.0
    %v1518 = vand.u32 %v448, 4294901760
    %1519 = vmatmul.mubr.f32.gmra.mrb[0].mxu0 %v1518
    %v1520 = vpop.f32.mrb[0].mxu0
    %v1521 = vadd.f32 %v1296, %v1520
    %v1522 = vpop.f32.mrb[0].mxu0
    %1523 = vmatprep.mubr.f32.mxu0 0.0
    %v1524 = vand.u32 %v449, 4294901760
    %1525 = vmatmul.mubr.f32.gmra.mrb[0].mxu0 %v1524
    %v1526 = vpop.f32.mrb[0].mxu0
    %v1527 = vadd.f32 %v1304, %v1526
    %v1528 = vpop.f32.mrb[0].mxu0
    %1529 = vmatprep.mubr.f32.mxu0 0.0
    %v1530 = vand.u32 %v450, 4294901760
    %1531 = vmatmul.mubr.f32.gmra.mrb[0].mxu0 %v1530
    %v1532 = vpop.f32.mrb[0].mxu0
    %v1533 = vadd.f32 %v1312, %v1532
    %v1534 = vpop.f32.mrb[0].mxu0
    %1535 = vmatprep.mubr.f32.mxu0 0.0
    %v1536 = vand.u32 %v451, 4294901760
    %1537 = vmatmul.mubr.f32.gmra.mrb[0].mxu0 %v1536
    %v1538 = vpop.f32.mrb[0].mxu0
    %v1539 = vadd.f32 %v1320, %v1538
    %v1540 = vpop.f32.mrb[0].mxu0
    %1541 = vmatprep.mubr.f32.mxu0 0.0
    %v1542 = vand.u32 %v452, 4294901760
    %1543 = vmatmul.mubr.f32.gmra.mrb[0].mxu0 %v1542
    %v1544 = vpop.f32.mrb[0].mxu0
    %v1545 = vadd.f32 %v1328, %v1544
    %v1546 = vpop.f32.mrb[0].mxu0
    %1547 = vmatprep.mubr.f32.mxu0 0.0
    %v1548 = vand.u32 %v453, 4294901760
    %1549 = vmatmul.mubr.f32.gmra.mrb[0].mxu0 %v1548
    %v1550 = vpop.f32.mrb[0].mxu0
    %v1551 = vadd.f32 %v1336, %v1550
    %v1552 = vpop.f32.mrb[0].mxu0
    %1553 = vmatprep.mubr.f32.mxu0 0.0
    %v1554 = vand.u32 %v454, 4294901760
    %1555 = vmatmul.mubr.f32.gmra.mrb[0].mxu0 %v1554
    %v1556 = vpop.f32.mrb[0].mxu0
    %v1557 = vadd.f32 %v1344, %v1556
    %v1558 = vpop.f32.mrb[0].mxu0
    %1559 = vmatprep.mubr.f32.mxu0 0.0
    %v1560 = vand.u32 %v455, 4294901760
    %1561 = vmatmul.mubr.f32.gmra.mrb[0].mxu0 %v1560
    %v1562 = vpop.f32.mrb[0].mxu0
    %v1563 = vadd.f32 %v1352, %v1562
    %v1564 = vpop.f32.mrb[0].mxu0
    %1565 = vmatprep.mubr.f32.mxu0 0.0
    %v1566 = vand.u32 %v456, 4294901760
    %1567 = vmatmul.mubr.f32.gmra.mrb[0].mxu0 %v1566
    %v1568 = vpop.f32.mrb[0].mxu0
    %v1569 = vadd.f32 %v1360, %v1568
    %v1570 = vpop.f32.mrb[0].mxu0
    %1571 = vdwg.mxu0
    %1572 = vmatprep.subr.mxu0 0.0
    %v1573 = vand.u32 %v47, 4294901760
    %1574 = vmatpush1.msra.mxu0 %v1573
    %1575 = vmatprep.subr.mxu0 0.0
    %v1576 = vand.u32 %v48, 4294901760
    %1577 = vmatpush1.msra.mxu0 %v1576
    %1578 = vmatprep.subr.mxu0 0.0
    %v1579 = vand.u32 %v49, 4294901760
    %1580 = vmatpush1.msra.mxu0 %v1579
    %1581 = vmatprep.subr.mxu0 0.0
    %v1582 = vand.u32 %v50, 4294901760
    %1583 = vmatpush1.msra.mxu0 %v1582
    %1584 = vmatprep.subr.mxu0 0.0
    %v1585 = vand.u32 %v51, 4294901760
    %1586 = vmatpush1.msra.mxu0 %v1585
    %1587 = vmatprep.subr.mxu0 0.0
    %v1588 = vand.u32 %v52, 4294901760
    %1589 = vmatpush1.msra.mxu0 %v1588
    %1590 = vmatprep.subr.mxu0 0.0
    %v1591 = vand.u32 %v53, 4294901760
    %1592 = vmatpush1.msra.mxu0 %v1591
    %1593 = vmatprep.subr.mxu0 0.0
    %v1594 = vand.u32 %v54, 4294901760
    %1595 = vmatpush1.msra.mxu0 %v1594
    %1596 = vmatprep.subr.mxu0 0.0
    %v1597 = vand.u32 %v55, 4294901760
    %1598 = vmatpush1.msra.mxu0 %v1597
    %1599 = vmatprep.subr.mxu0 0.0
    %v1600 = vand.u32 %v56, 4294901760
    %1601 = vmatpush1.msra.mxu0 %v1600
    %1602 = vmatprep.subr.mxu0 0.0
    %v1603 = vand.u32 %v57, 4294901760
    %1604 = vmatpush1.msra.mxu0 %v1603
    %1605 = vmatprep.subr.mxu0 0.0
    %v1606 = vand.u32 %v58, 4294901760
    %1607 = vmatpush1.msra.mxu0 %v1606
    %1608 = vmatprep.subr.mxu0 0.0
    %v1609 = vand.u32 %v59, 4294901760
    %1610 = vmatpush1.msra.mxu0 %v1609
    %1611 = vmatprep.subr.mxu0 0.0
    %v1612 = vand.u32 %v60, 4294901760
    %1613 = vmatpush1.msra.mxu0 %v1612
    %1614 = vmatprep.subr.mxu0 0.0
    %v1615 = vand.u32 %v61, 4294901760
    %1616 = vmatpush1.msra.mxu0 %v1615
    %1617 = vmatprep.subr.mxu0 0.0
    %v1618 = vand.u32 %v62, 4294901760
    %1619 = vmatpush1.msra.mxu0 %v1618
    %1620 = vmatprep.subr.mxu0 0.0
    %1621 = vmatpush1.msra.mxu0 0.0
    %1622 = vmatprep.subr.mxu0 0.0
    %1623 = vmatpush1.msra.mxu0 0.0
    %1624 = vmatprep.subr.mxu0 0.0
    %1625 = vmatpush1.msra.mxu0 0.0
    %1626 = vmatprep.subr.mxu0 0.0
    %1627 = vmatpush1.msra.mxu0 0.0
    %1628 = vmatprep.subr.mxu0 0.0
    %1629 = vmatpush1.msra.mxu0 0.0
    %1630 = vmatprep.subr.mxu0 0.0
    %1631 = vmatpush1.msra.mxu0 0.0
    %1632 = vmatprep.subr.mxu0 0.0
    %1633 = vmatpush1.msra.mxu0 0.0
    %1634 = vmatprep.subr.mxu0 0.0
    %1635 = vmatpush1.msra.mxu0 0.0
    %1636 = vmatprep.subr.mxu0 0.0
    %1637 = vmatpush1.msra.mxu0 0.0
    %1638 = vmatprep.subr.mxu0 0.0
    %1639 = vmatpush1.msra.mxu0 0.0
    %1640 = vmatprep.subr.mxu0 0.0
    %1641 = vmatpush1.msra.mxu0 0.0
    %1642 = vmatprep.subr.mxu0 0.0
    %1643 = vmatpush1.msra.mxu0 0.0
    %1644 = vmatprep.subr.mxu0 0.0
    %1645 = vmatpush1.msra.mxu0 0.0
    %1646 = vmatprep.subr.mxu0 0.0
    %1647 = vmatpush1.msra.mxu0 0.0
    %1648 = vmatprep.subr.mxu0 0.0
    %1649 = vmatpush1.msra.mxu0 0.0
    %1650 = vmatprep.subr.mxu0 0.0
    %1651 = vmatpush1.msra.mxu0 0.0
    %1652 = vmatprep.mubr.f32.mxu0 0.0
    %v1653 = vand.u32 %v441, 4294901760
    %1654 = vmatmul.mubr.f32.gmra.mrb[0].mxu0 %v1653
    %v1655 = vpop.f32.mrb[0].mxu0
    %v1656 = vadd.f32 %v1479, %v1655
    %v1657 = vpop.f32.mrb[0].mxu0
    %1658 = vmatprep.mubr.f32.mxu0 0.0
    %v1659 = vand.u32 %v442, 4294901760
    %1660 = vmatmul.mubr.f32.gmra.mrb[0].mxu0 %v1659
    %v1661 = vpop.f32.mrb[0].mxu0
    %v1662 = vadd.f32 %v1485, %v1661
    %v1663 = vpop.f32.mrb[0].mxu0
    %1664 = vmatprep.mubr.f32.mxu0 0.0
    %v1665 = vand.u32 %v443, 4294901760
    %1666 = vmatmul.mubr.f32.gmra.mrb[0].mxu0 %v1665
    %v1667 = vpop.f32.mrb[0].mxu0
    %v1668 = vadd.f32 %v1491, %v1667
    %v1669 = vpop.f32.mrb[0].mxu0
    %1670 = vmatprep.mubr.f32.mxu0 0.0
    %v1671 = vand.u32 %v444, 4294901760
    %1672 = vmatmul.mubr.f32.gmra.mrb[0].mxu0 %v1671
    %v1673 = vpop.f32.mrb[0].mxu0
    %v1674 = vadd.f32 %v1497, %v1673
    %v1675 = vpop.f32.mrb[0].mxu0
    %1676 = vmatprep.mubr.f32.mxu0 0.0
    %v1677 = vand.u32 %v445, 4294901760
    %1678 = vmatmul.mubr.f32.gmra.mrb[0].mxu0 %v1677
    %v1679 = vpop.f32.mrb[0].mxu0
    %v1680 = vadd.f32 %v1503, %v1679
    %v1681 = vpop.f32.mrb[0].mxu0
    %1682 = vmatprep.mubr.f32.mxu0 0.0
    %v1683 = vand.u32 %v446, 4294901760
    %1684 = vmatmul.mubr.f32.gmra.mrb[0].mxu0 %v1683
    %v1685 = vpop.f32.mrb[0].mxu0
    %v1686 = vadd.f32 %v1509, %v1685
    %v1687 = vpop.f32.mrb[0].mxu0
    %1688 = vmatprep.mubr.f32.mxu0 0.0
    %v1689 = vand.u32 %v447, 4294901760
    %1690 = vmatmul.mubr.f32.gmra.mrb[0].mxu0 %v1689
    %v1691 = vpop.f32.mrb[0].mxu0
    %v1692 = vadd.f32 %v1515, %v1691
    %v1693 = vpop.f32.mrb[0].mxu0
    %1694 = vmatprep.mubr.f32.mxu0 0.0
    %v1695 = vand.u32 %v448, 4294901760
    %1696 = vmatmul.mubr.f32.gmra.mrb[0].mxu0 %v1695
    %v1697 = vpop.f32.mrb[0].mxu0
    %v1698 = vadd.f32 %v1521, %v1697
    %v1699 = vpop.f32.mrb[0].mxu0
    %1700 = vmatprep.mubr.f32.mxu0 0.0
    %v1701 = vand.u32 %v449, 4294901760
    %1702 = vmatmul.mubr.f32.gmra.mrb[0].mxu0 %v1701
    %v1703 = vpop.f32.mrb[0].mxu0
    %v1704 = vadd.f32 %v1527, %v1703
    %v1705 = vpop.f32.mrb[0].mxu0
    %1706 = vmatprep.mubr.f32.mxu0 0.0
    %v1707 = vand.u32 %v450, 4294901760
    %1708 = vmatmul.mubr.f32.gmra.mrb[0].mxu0 %v1707
    %v1709 = vpop.f32.mrb[0].mxu0
    %v1710 = vadd.f32 %v1533, %v1709
    %v1711 = vpop.f32.mrb[0].mxu0
    %1712 = vmatprep.mubr.f32.mxu0 0.0
    %v1713 = vand.u32 %v451, 4294901760
    %1714 = vmatmul.mubr.f32.gmra.mrb[0].mxu0 %v1713
    %v1715 = vpop.f32.mrb[0].mxu0
    %v1716 = vadd.f32 %v1539, %v1715
    %v1717 = vpop.f32.mrb[0].mxu0
    %1718 = vmatprep.mubr.f32.mxu0 0.0
    %v1719 = vand.u32 %v452, 4294901760
    %1720 = vmatmul.mubr.f32.gmra.mrb[0].mxu0 %v1719
    %v1721 = vpop.f32.mrb[0].mxu0
    %v1722 = vadd.f32 %v1545, %v1721
    %v1723 = vpop.f32.mrb[0].mxu0
    %1724 = vmatprep.mubr.f32.mxu0 0.0
    %v1725 = vand.u32 %v453, 4294901760
    %1726 = vmatmul.mubr.f32.gmra.mrb[0].mxu0 %v1725
    %v1727 = vpop.f32.mrb[0].mxu0
    %v1728 = vadd.f32 %v1551, %v1727
    %v1729 = vpop.f32.mrb[0].mxu0
    %1730 = vmatprep.mubr.f32.mxu0 0.0
    %v1731 = vand.u32 %v454, 4294901760
    %1732 = vmatmul.mubr.f32.gmra.mrb[0].mxu0 %v1731
    %v1733 = vpop.f32.mrb[0].mxu0
    %v1734 = vadd.f32 %v1557, %v1733
    %v1735 = vpop.f32.mrb[0].mxu0
    %1736 = vmatprep.mubr.f32.mxu0 0.0
    %v1737 = vand.u32 %v455, 4294901760
    %1738 = vmatmul.mubr.f32.gmra.mrb[0].mxu0 %v1737
    %v1739 = vpop.f32.mrb[0].mxu0
    %v1740 = vadd.f32 %v1563, %v1739
    %v1741 = vpop.f32.mrb[0].mxu0
    %1742 = vmatprep.mubr.f32.mxu0 0.0
    %v1743 = vand.u32 %v456, 4294901760
    %1744 = vmatmul.mubr.f32.gmra.mrb[0].mxu0 %v1743
    %v1745 = vpop.f32.mrb[0].mxu0
    %v1746 = vadd.f32 %v1569, %v1745
    %v1747 = vpop.f32.mrb[0].mxu0
    %1748 = vdwg.mxu0
    %v1749 = vmax.f32 %v1656, 0.0
    %v1750 = vmax.f32 %v1662, 0.0
    %v1751 = vmax.f32 %v1668, 0.0
    %v1752 = vmax.f32 %v1674, 0.0
    %v1753 = vmax.f32 %v1680, 0.0
    %v1754 = vmax.f32 %v1686, 0.0
    %v1755 = vmax.f32 %v1692, 0.0
    %v1756 = vmax.f32 %v1698, 0.0
    %v1757 = vmax.f32 %v1704, 0.0
    %v1758 = vmax.f32 %v1710, 0.0
    %v1759 = vmax.f32 %v1716, 0.0
    %v1760 = vmax.f32 %v1722, 0.0
    %v1761 = vmax.f32 %v1728, 0.0
    %v1762 = vmax.f32 %v1734, 0.0
    %v1763 = vmax.f32 %v1740, 0.0
    %v1764 = vmax.f32 %v1746, 0.0
    %v1766 = vlaneseq
    %v1767 = vshrl.u32 %v1766, 7
    %v1768 = vsub.s32 0, %v1767
    %v1769 = vrot.slane %v65, %v1768
    %v1771 = vmul.f32 %v1749, %v1769
    %v1772 = vmul.f32 %v1750, %v1769
    %v1773 = vmul.f32 %v1751, %v1769
    %v1774 = vmul.f32 %v1752, %v1769
    %v1775 = vmul.f32 %v1753, %v1769
    %v1776 = vmul.f32 %v1754, %v1769
    %v1777 = vmul.f32 %v1755, %v1769
    %v1778 = vmul.f32 %v1756, %v1769
    %v1779 = vmul.f32 %v1757, %v1769
    %v1780 = vmul.f32 %v1758, %v1769
    %v1781 = vmul.f32 %v1759, %v1769
    %v1782 = vmul.f32 %v1760, %v1769
    %v1783 = vmul.f32 %v1761, %v1769
    %v1784 = vmul.f32 %v1762, %v1769
    %v1785 = vmul.f32 %v1763, %v1769
    %v1786 = vmul.f32 %v1764, %v1769
    %1787 = vadd.xlane.f32.xlu0 %v1771
    %v1788 = vpop.xlane.xlu0 %1787
    %1789 = vadd.xlane.f32.xlu0 %v1772
    %v1790 = vpop.xlane.xlu0 %1789
    %1791 = vadd.xlane.f32.xlu0 %v1773
    %v1792 = vpop.xlane.xlu0 %1791
    %1793 = vadd.xlane.f32.xlu0 %v1774
    %v1794 = vpop.xlane.xlu0 %1793
    %1795 = vadd.xlane.f32.xlu0 %v1775
    %v1796 = vpop.xlane.xlu0 %1795
    %1797 = vadd.xlane.f32.xlu0 %v1776
    %v1798 = vpop.xlane.xlu0 %1797
    %1799 = vadd.xlane.f32.xlu0 %v1777
    %v1800 = vpop.xlane.xlu0 %1799
    %1801 = vadd.xlane.f32.xlu0 %v1778
    %v1802 = vpop.xlane.xlu0 %1801
    %1803 = vadd.xlane.f32.xlu0 %v1779
    %v1804 = vpop.xlane.xlu0 %1803
    %1805 = vadd.xlane.f32.xlu0 %v1780
    %v1806 = vpop.xlane.xlu0 %1805
    %1807 = vadd.xlane.f32.xlu0 %v1781
    %v1808 = vpop.xlane.xlu0 %1807
    %1809 = vadd.xlane.f32.xlu0 %v1782
    %v1810 = vpop.xlane.xlu0 %1809
    %1811 = vadd.xlane.f32.xlu0 %v1783
    %v1812 = vpop.xlane.xlu0 %1811
    %1813 = vadd.xlane.f32.xlu0 %v1784
    %v1814 = vpop.xlane.xlu0 %1813
    %1815 = vadd.xlane.f32.xlu0 %v1785
    %v1816 = vpop.xlane.xlu0 %1815
    %1817 = vadd.xlane.f32.xlu0 %v1786
    %v1818 = vpop.xlane.xlu0 %1817
    %v1819 = vstv %s66
    %v1820 = vadd.f32 %v1788, %v1819
    %v1821 = vadd.f32 %v1790, %v1819
    %v1822 = vadd.f32 %v1792, %v1819
    %v1823 = vadd.f32 %v1794, %v1819
    %v1824 = vadd.f32 %v1796, %v1819
    %v1825 = vadd.f32 %v1798, %v1819
    %v1826 = vadd.f32 %v1800, %v1819
    %v1827 = vadd.f32 %v1802, %v1819
    %v1828 = vadd.f32 %v1804, %v1819
    %v1829 = vadd.f32 %v1806, %v1819
    %v1830 = vadd.f32 %v1808, %v1819
    %v1831 = vadd.f32 %v1810, %v1819
    %v1832 = vadd.f32 %v1812, %v1819
    %v1833 = vadd.f32 %v1814, %v1819
    %v1834 = vadd.f32 %v1816, %v1819
    %v1835 = vadd.f32 %v1818, %v1819
    %v1836 = vlaneseq
    %v1837 = vand.u32 %v1836, 127
    %vm1838 = vcmp.eq.s32.totalorder %v1837, 0
    %1840 = vset.pattern.permute.xlu0 0
    %1841 = vperm.xlu0 %1840, %v425
    %v1842 = vpop.permute.xlu0 %1841
    %1845 = vset.pattern.permute.xlu0 0
    %1846 = vperm.xlu0 %1845, %v426
    %v1847 = vpop.permute.xlu0 %1846
    %1850 = vset.pattern.permute.xlu0 0
    %1851 = vperm.xlu0 %1850, %v427
    %v1852 = vpop.permute.xlu0 %1851
    %1855 = vset.pattern.permute.xlu0 0
    %1856 = vperm.xlu0 %1855, %v428
    %v1857 = vpop.permute.xlu0 %1856
    %1860 = vset.pattern.permute.xlu0 0
    %1861 = vperm.xlu0 %1860, %v429
    %v1862 = vpop.permute.xlu0 %1861
    %1865 = vset.pattern.permute.xlu0 0
    %1866 = vperm.xlu0 %1865, %v430
    %v1867 = vpop.permute.xlu0 %1866
    %1870 = vset.pattern.permute.xlu0 0
    %1871 = vperm.xlu0 %1870, %v431
    %v1872 = vpop.permute.xlu0 %1871
    %1875 = vset.pattern.permute.xlu0 0
    %1876 = vperm.xlu0 %1875, %v432
    %v1877 = vpop.permute.xlu0 %1876
    %1880 = vset.pattern.permute.xlu0 0
    %1881 = vperm.xlu0 %1880, %v433
    %v1882 = vpop.permute.xlu0 %1881
    %1885 = vset.pattern.permute.xlu0 0
    %1886 = vperm.xlu0 %1885, %v434
    %v1887 = vpop.permute.xlu0 %1886
    %1890 = vset.pattern.permute.xlu0 0
    %1891 = vperm.xlu0 %1890, %v435
    %v1892 = vpop.permute.xlu0 %1891
    %1895 = vset.pattern.permute.xlu0 0
    %1896 = vperm.xlu0 %1895, %v436
    %v1897 = vpop.permute.xlu0 %1896
    %1900 = vset.pattern.permute.xlu0 0
    %1901 = vperm.xlu0 %1900, %v437
    %v1902 = vpop.permute.xlu0 %1901
    %1905 = vset.pattern.permute.xlu0 0
    %1906 = vperm.xlu0 %1905, %v438
    %v1907 = vpop.permute.xlu0 %1906
    %1910 = vset.pattern.permute.xlu0 0
    %1911 = vperm.xlu0 %1910, %v439
    %v1912 = vpop.permute.xlu0 %1911
    %1915 = vset.pattern.permute.xlu0 0
    %1916 = vperm.xlu0 %1915, %v440
    %v1917 = vpop.permute.xlu0 %1916
    %v1919 = vsel %vm1838, %v1820, %v1842
    %v1920 = vsel %vm1838, %v1821, %v1847
    %v1921 = vsel %vm1838, %v1822, %v1852
    %v1922 = vsel %vm1838, %v1823, %v1857
    %v1923 = vsel %vm1838, %v1824, %v1862
    %v1924 = vsel %vm1838, %v1825, %v1867
    %v1925 = vsel %vm1838, %v1826, %v1872
    %v1926 = vsel %vm1838, %v1827, %v1877
    %v1927 = vsel %vm1838, %v1828, %v1882
    %v1928 = vsel %vm1838, %v1829, %v1887
    %v1929 = vsel %vm1838, %v1830, %v1892
    %v1930 = vsel %vm1838, %v1831, %v1897
    %v1931 = vsel %vm1838, %v1832, %v1902
    %v1932 = vsel %vm1838, %v1833, %v1907
    %v1933 = vsel %vm1838, %v1834, %v1912
    %v1934 = vsel %vm1838, %v1835, %v1917
    %vm1935 = vcmask 15360
    %1936 = vst.msk [vmem:[%s9] sm:$0xff] %vm1935, %v1919
    %1937 = vst.msk [vmem:[%s9 + $0x8] sm:$0xff] %vm1935, %v1920
    %1938 = vst.msk [vmem:[%s9 + $0x10] sm:$0xff] %vm1935, %v1921
    %1939 = vst.msk [vmem:[%s9 + $0x18] sm:$0xff] %vm1935, %v1922
    %1940 = vst.msk [vmem:[%s9 + $0x20] sm:$0xff] %vm1935, %v1923
    %1941 = vst.msk [vmem:[%s9 + $0x28] sm:$0xff] %vm1935, %v1924
    %1942 = vst.msk [vmem:[%s9 + $0x30] sm:$0xff] %vm1935, %v1925
    %1943 = vst.msk [vmem:[%s9 + $0x38] sm:$0xff] %vm1935, %v1926
    %1944 = vst.msk [vmem:[%s9 + $0x40] sm:$0xff] %vm1935, %v1927
    %1945 = vst.msk [vmem:[%s9 + $0x48] sm:$0xff] %vm1935, %v1928
    %1946 = vst.msk [vmem:[%s9 + $0x50] sm:$0xff] %vm1935, %v1929
    %1947 = vst.msk [vmem:[%s9 + $0x58] sm:$0xff] %vm1935, %v1930
    %1948 = vst.msk [vmem:[%s9 + $0x60] sm:$0xff] %vm1935, %v1931
    %1949 = vst.msk [vmem:[%s9 + $0x68] sm:$0xff] %vm1935, %v1932
    %1950 = vst.msk [vmem:[%s9 + $0x70] sm:$0xff] %vm1935, %v1933
    %1951 = vst.msk [vmem:[%s9 + $0x78] sm:$0xff] %vm1935, %v1934
    // Predicated region
    $region42: #{mountain_car_distillery_forward.1} parent=1 // pred_check
      _
    $region43: #{mountain_car_distillery_forward.1} parent=1 // pred_check_branch
      %1953 = sbr.rel (0) target = $region45
    $region44: #{mountain_car_distillery_forward.1} parent=1 // pred_region
      _
    $region45: #{mountain_car_distillery_forward.1} parent=1 // pred_fallthru
      _
    // Predicated region
    $region46: #{mountain_car_distillery_forward.1} parent=1 // pred_check
      _
    $region47: #{mountain_car_distillery_forward.1} parent=1 // pred_check_branch
      %1955 = sbr.rel (0) target = $region49
    $region48: #{mountain_car_distillery_forward.1} parent=1 // pred_region
      _
    $region49: #{mountain_car_distillery_forward.1} parent=1 // pred_fallthru
      _
    %1956 = vsyncpa [#allocation5], 1

</llo_original>
